<compile_context>
chip_gen: v7x
topology: tpu7x:2x2x1
jax: 0.10.0
libtpu: 0.0.40
codegen_flags: <defaults>
</compile_context>

<pallas_src>
from functools import partial

import jax
import jax.numpy as jnp
from jax.experimental import pallas as pl
from jax.experimental.pallas import tpu as pltpu


def _upsample_conv_kernel(x_ref, w_ref, b_ref, o_ref, *, H, W, T, U, s,
                          row_starts, col_start):
    """One grid step = one batch element.

    x_ref: (1, Hp, Wp, Cin)       zero-padded NHWC input (original resolution)
    w_ref: (s, T*U*Cin, s*Cout)   per-row-phase, column-phase-fused weights (bf16)
    b_ref: (1, s*Cout)            bias tiled over column phases
    o_ref: (1, s, H*W, s*Cout)    lane-dense output slabs (one per row phase)
    """
    Cin = x_ref.shape[-1]
    # Hoisted bias broadcast: computed once, reused by every phase matmul.
    b = b_ref[...].astype(jnp.float32)                       # (1, s*Cout)

    for qh in range(s):                     # static row-phase loop (grid is (N,))
        sh = row_starts[qh]                 # python int -> static slices below
        # im2col slab over the UNION of the column taps of all s column phases:
        # (H*W, T*U*Cin).  One slab -> one fused MXU matmul -> 128-lane output.
        patches = []
        for dh in range(T):
            for u in range(U):
                p = x_ref[0, pl.ds(sh + dh, H), pl.ds(col_start + u, W), :]
                patches.append(p.reshape(H * W, Cin))
        cols = jnp.concatenate(patches, axis=-1).astype(jnp.bfloat16)
        acc = jnp.dot(cols, w_ref[qh], preferred_element_type=jnp.float32)
        o_ref[0, qh] = (acc + b).astype(o_ref.dtype)


def upsample_conv_layer(x_nchw, weight, bias, *, stride, padding=1):
    """Forward pass of UpsampleConvLayer (ConvTranspose2d, padding=1).

    x_nchw : (N, Cin, H, W)        PyTorch NCHW input
    weight : (Cin, Cout, K, K)     PyTorch ConvTranspose2d weight layout
    bias   : (Cout,)
    returns: (N, Cout, s*H, s*W)   NCHW, matching PyTorch
    """
    N, Cin, H, W = x_nchw.shape
    wCin, Cout, K, K2 = weight.shape
    assert K == K2 and wCin == Cin
    s = int(stride)
    assert padding <= K - 1, "padding > K-1 not supported"
    assert K % s == 0, "sub-pixel decomposition needs kernel_size % stride == 0"
    assert K - 2 * padding == s, (
        "fast path supports the module's config (K - 2*padding == stride), "
        "e.g. kernel_size=4, stride=2, padding=1")
    # TODO(synk): general stride/padding/output_padding combos need per-phase
    # output counts + a dilated fallback; DecoderTransformer_x2 never uses them.

    T = K // s                                # taps per spatial dim per phase
    pe = K - 1 - padding                      # edge pad of equivalent regular conv
    H_out, W_out = s * H, s * W

    # Per-phase input base offsets (into the unpadded input) and the global pad.
    bases = [-((pe - q) // s) for q in range(s)]            # = ceil((q - pe)/s)
    pad_lo = max(0, -min(bases))
    pad_hi = max(0, max(bases) + T - 1)
    row_starts = tuple(b + pad_lo for b in bases)           # per-row-phase window start
    col_start = min(bases) + pad_lo                         # union column window start
    U = (max(bases) - min(bases)) + T                       # union column-tap count

    # NCHW -> NHWC (channels on lanes) + spatial zero pad.  NO zero insertion:
    # each of the stride^2 phases reads the original-resolution input directly.
    x = jnp.transpose(x_nchw, (0, 2, 3, 1))
    x_pad = jnp.pad(x, ((0, 0), (pad_lo, pad_hi), (pad_lo, pad_hi), (0, 0)))
    Hp, Wp = x_pad.shape[1], x_pad.shape[2]

    # Equivalent regular-conv weight (spatially flipped, HWIO).
    w_flip = jnp.transpose(weight[:, :, ::-1, ::-1], (2, 3, 0, 1))  # (K,K,Cin,Cout)

    # Per-row-phase weights, fused over column phases on the union tap set:
    # (s, T, U, Cin, s*Cout); rows a column phase doesn't use stay zero.
    w_fused = jnp.zeros((s, T, U, Cin, s * Cout), w_flip.dtype)
    for qh in range(s):
        rh = (pe - qh) % s
        for qw in range(s):
            rw = (pe - qw) % s
            off = bases[qw] - min(bases)
            for th in range(T):
                for tw in range(T):
                    w_fused = w_fused.at[
                        qh, th, off + tw, :, qw * Cout:(qw + 1) * Cout
                    ].set(w_flip[rh + th * s, rw + tw * s])
    w_fused = w_fused.reshape(s, T * U * Cin, s * Cout).astype(jnp.bfloat16)
    b_tiled = jnp.tile(bias, s).reshape(1, s * Cout)

    kernel = partial(_upsample_conv_kernel, H=H, W=W, T=T, U=U, s=s,
                     row_starts=row_starts, col_start=col_start)

    out_phases = pl.pallas_call(
        kernel,
        out_shape=jax.ShapeDtypeStruct((N, s, H * W, s * Cout), x.dtype),
        grid_spec=pltpu.PrefetchScalarGridSpec(
            num_scalar_prefetch=0,
            grid=(N,),                        # one step per batch element
            in_specs=[
                # whole padded image for this batch element
                pl.BlockSpec((1, Hp, Wp, Cin), lambda n: (n, 0, 0, 0)),
                # fused weights: constant index map -> DMA'd once, stays resident
                pl.BlockSpec((s, T * U * Cin, s * Cout), lambda n: (0, 0, 0)),
                pl.BlockSpec((1, s * Cout), lambda n: (0, 0)),
            ],
            out_specs=pl.BlockSpec((1, s, H * W, s * Cout),
                                   lambda n: (n, 0, 0, 0)),
        ),
        compiler_params=pltpu.CompilerParams(
            dimension_semantics=("parallel",)),
    )(x_pad, w_fused, b_tiled)

    # Pixel-shuffle the stride^2 phases back into NCHW (single fused transpose).
    out = out_phases.reshape(N, s, H, W, s, Cout)            # (n, qh, h, w, qw, c)
    out = jnp.transpose(out, (0, 5, 2, 1, 3, 4))             # (n, c, h, qh, w, qw)
    return out.reshape(N, Cout, H_out, W_out)


if __name__ == "__main__":
    # Shapes consistent with DecoderTransformer_x2.convd2x / convd1x:
    # UpsampleConvLayer(embedding_dim=64, embedding_dim=64, kernel_size=4, stride=2)
    N, C, H, W = 2, 64, 16, 16
    K, stride, padding = 4, 2, 1

    key = jax.random.PRNGKey(0)
    kx, kw, kb = jax.random.split(key, 3)
    x = jax.random.normal(kx, (N, C, H, W), jnp.float32)
    weight = jax.random.normal(kw, (C, C, K, K), jnp.float32) * 0.05
    bias = jax.random.normal(kb, (C,), jnp.float32) * 0.1

    out = upsample_conv_layer(x, weight, bias, stride=stride, padding=padding)
    out = jax.block_until_ready(out)

    # Independent reference: XLA dilated conv == torch.nn.ConvTranspose2d(padding=1).
    pe = K - 1 - padding
    w_conv = jnp.transpose(weight[:, :, ::-1, ::-1], (2, 3, 0, 1))
    ref = jax.lax.conv_general_dilated(
        jnp.transpose(x, (0, 2, 3, 1)), w_conv,
        window_strides=(1, 1),
        padding=[(pe, pe), (pe, pe)],
        lhs_dilation=(stride, stride),
        dimension_numbers=("NHWC", "HWIO", "NHWC"),
    ) + bias
    ref = jnp.transpose(ref, (0, 3, 1, 2))

    assert out.shape == (N, C, 2 * H, 2 * W), out.shape
    max_err = float(jnp.max(jnp.abs(out - ref)))
    # bf16 MXU operands (f32 accumulation) -> relaxed tolerance.
    assert jnp.allclose(out, ref, atol=3e-2, rtol=3e-2), f"max abs err {max_err}"
    print("KERNEL_OK")
</pallas_src>

<mosaic_0001>
module attributes {stable_mosaic.version = 11 : i64} {
  func.func @_upsample_conv_kernel(%arg0: i32, %arg1: memref<1x18x18x64xf32, #tpu.memory_space<vmem>>, %arg2: memref<2x384x128xbf16, #tpu.memory_space<vmem>>, %arg3: memref<1x128xf32, #tpu.memory_space<vmem>>, %arg4: memref<1x2x256x128xf32, #tpu.memory_space<vmem>>) attributes {dimension_semantics = [#tpu.dimension_semantics<parallel>], iteration_bounds = array<i64: 2>, scalar_prefetch = 0 : i64, scratch_operands = 0 : i64, tpu.core_type = #tpu.core_type<tc>, window_params = [{transform_indices = @transform_0, window_bounds = array<i64: 1, 18, 18, 64>}, {pipeline_mode = #tpu.pipeline_mode<synchronous>, transform_indices = @transform_1, window_bounds = array<i64: 2, 384, 128>}, {pipeline_mode = #tpu.pipeline_mode<synchronous>, transform_indices = @transform_2, window_bounds = array<i64: 1, 128>}, {transform_indices = @transform_3, window_bounds = array<i64: 1, 2, 256, 128>}]} {
    %c0 = arith.constant 0 : index
    %c0_0 = arith.constant 0 : index
    %0 = vector.load %arg3[%c0, %c0_0] : memref<1x128xf32, #tpu.memory_space<vmem>>, vector<1x128xf32>
    %c0_1 = arith.constant 0 : index
    %c0_2 = arith.constant 0 : index
    %c0_3 = arith.constant 0 : index
    %c0_4 = arith.constant 0 : index
    %1 = vector.load %arg1[%c0_1, %c0_2, %c0_3, %c0_4] : memref<1x18x18x64xf32, #tpu.memory_space<vmem>>, vector<1x16x16x64xf32>
    %2 = vector.shape_cast %1 : vector<1x16x16x64xf32> to vector<16x16x64xf32>
    %3 = vector.shape_cast %2 : vector<16x16x64xf32> to vector<256x64xf32>
    %c0_5 = arith.constant 0 : index
    %c0_6 = arith.constant 0 : index
    %c1 = arith.constant 1 : index
    %c0_7 = arith.constant 0 : index
    %4 = vector.load %arg1[%c0_5, %c0_6, %c1, %c0_7] : memref<1x18x18x64xf32, #tpu.memory_space<vmem>>, vector<1x16x16x64xf32>
    %5 = vector.shape_cast %4 : vector<1x16x16x64xf32> to vector<16x16x64xf32>
    %6 = vector.shape_cast %5 : vector<16x16x64xf32> to vector<256x64xf32>
    %c0_8 = arith.constant 0 : index
    %c0_9 = arith.constant 0 : index
    %c2 = arith.constant 2 : index
    %c0_10 = arith.constant 0 : index
    %7 = vector.load %arg1[%c0_8, %c0_9, %c2, %c0_10] : memref<1x18x18x64xf32, #tpu.memory_space<vmem>>, vector<1x16x16x64xf32>
    %8 = vector.shape_cast %7 : vector<1x16x16x64xf32> to vector<16x16x64xf32>
    %9 = vector.shape_cast %8 : vector<16x16x64xf32> to vector<256x64xf32>
    %c0_11 = arith.constant 0 : index
    %c1_12 = arith.constant 1 : index
    %c0_13 = arith.constant 0 : index
    %c0_14 = arith.constant 0 : index
    %10 = vector.load %arg1[%c0_11, %c1_12, %c0_13, %c0_14] : memref<1x18x18x64xf32, #tpu.memory_space<vmem>>, vector<1x16x16x64xf32>
    %11 = vector.shape_cast %10 : vector<1x16x16x64xf32> to vector<16x16x64xf32>
    %12 = vector.shape_cast %11 : vector<16x16x64xf32> to vector<256x64xf32>
    %c0_15 = arith.constant 0 : index
    %c1_16 = arith.constant 1 : index
    %c1_17 = arith.constant 1 : index
    %c0_18 = arith.constant 0 : index
    %13 = vector.load %arg1[%c0_15, %c1_16, %c1_17, %c0_18] : memref<1x18x18x64xf32, #tpu.memory_space<vmem>>, vector<1x16x16x64xf32>
    %14 = vector.shape_cast %13 : vector<1x16x16x64xf32> to vector<16x16x64xf32>
    %15 = vector.shape_cast %14 : vector<16x16x64xf32> to vector<256x64xf32>
    %c0_19 = arith.constant 0 : index
    %c1_20 = arith.constant 1 : index
    %c2_21 = arith.constant 2 : index
    %c0_22 = arith.constant 0 : index
    %16 = vector.load %arg1[%c0_19, %c1_20, %c2_21, %c0_22] : memref<1x18x18x64xf32, #tpu.memory_space<vmem>>, vector<1x16x16x64xf32>
    %17 = vector.shape_cast %16 : vector<1x16x16x64xf32> to vector<16x16x64xf32>
    %18 = vector.shape_cast %17 : vector<16x16x64xf32> to vector<256x64xf32>
    %19 = tpu.concatenate %3, %6, %9, %12, %15, %18 in 1 : vector<256x64xf32>, vector<256x64xf32>, vector<256x64xf32>, vector<256x64xf32>, vector<256x64xf32>, vector<256x64xf32> -> vector<256x384xf32>
    %20 = arith.truncf %19 : vector<256x384xf32> to vector<256x384xbf16>
    %c0_23 = arith.constant 0 : index
    %c0_24 = arith.constant 0 : index
    %c0_25 = arith.constant 0 : index
    %21 = vector.load %arg2[%c0_23, %c0_24, %c0_25] : memref<2x384x128xbf16, #tpu.memory_space<vmem>>, vector<1x384x128xbf16>
    %22 = vector.shape_cast %21 : vector<1x384x128xbf16> to vector<384x128xbf16>
    %cst = arith.constant dense<0.000000e+00> : vector<256x128xf32>
    %23 = tpu.matmul %20, %22, %cst {dimension_numbers = #tpu.dot_dimension_numbers<[1], [0], [0], [1], [0, 0, 1, 1], [], []>} : vector<256x384xbf16>, vector<384x128xbf16>, vector<256x128xf32> -> vector<256x128xf32>
    %24 = vector.broadcast %0 : vector<1x128xf32> to vector<256x128xf32>
    %25 = arith.addf %23, %24 : vector<256x128xf32>
    %c0_26 = arith.constant 0 : index
    %c0_27 = arith.constant 0 : index
    %c0_28 = arith.constant 0 : index
    %c0_29 = arith.constant 0 : index
    %26 = vector.load %arg4[%c0_26, %c0_27, %c0_28, %c0_29] : memref<1x2x256x128xf32, #tpu.memory_space<vmem>>, vector<1x1x256x128xf32>
    %27 = vector.shape_cast %26 : vector<1x1x256x128xf32> to vector<256x128xf32>
    %28 = vector.shape_cast %25 : vector<256x128xf32> to vector<1x1x256x128xf32>
    tpu.vector_store %arg4[%c0_26, %c0_27, %c0_28, %c0_29], %28 {strides = array<i32>} : memref<1x2x256x128xf32, #tpu.memory_space<vmem>>, vector<1x1x256x128xf32>,
    %c0_30 = arith.constant 0 : index
    %c1_31 = arith.constant 1 : index
    %c0_32 = arith.constant 0 : index
    %c0_33 = arith.constant 0 : index
    %29 = vector.load %arg1[%c0_30, %c1_31, %c0_32, %c0_33] : memref<1x18x18x64xf32, #tpu.memory_space<vmem>>, vector<1x16x16x64xf32>
    %30 = vector.shape_cast %29 : vector<1x16x16x64xf32> to vector<16x16x64xf32>
    %31 = vector.shape_cast %30 : vector<16x16x64xf32> to vector<256x64xf32>
    %c0_34 = arith.constant 0 : index
    %c1_35 = arith.constant 1 : index
    %c1_36 = arith.constant 1 : index
    %c0_37 = arith.constant 0 : index
    %32 = vector.load %arg1[%c0_34, %c1_35, %c1_36, %c0_37] : memref<1x18x18x64xf32, #tpu.memory_space<vmem>>, vector<1x16x16x64xf32>
    %33 = vector.shape_cast %32 : vector<1x16x16x64xf32> to vector<16x16x64xf32>
    %34 = vector.shape_cast %33 : vector<16x16x64xf32> to vector<256x64xf32>
    %c0_38 = arith.constant 0 : index
    %c1_39 = arith.constant 1 : index
    %c2_40 = arith.constant 2 : index
    %c0_41 = arith.constant 0 : index
    %35 = vector.load %arg1[%c0_38, %c1_39, %c2_40, %c0_41] : memref<1x18x18x64xf32, #tpu.memory_space<vmem>>, vector<1x16x16x64xf32>
    %36 = vector.shape_cast %35 : vector<1x16x16x64xf32> to vector<16x16x64xf32>
    %37 = vector.shape_cast %36 : vector<16x16x64xf32> to vector<256x64xf32>
    %c0_42 = arith.constant 0 : index
    %c2_43 = arith.constant 2 : index
    %c0_44 = arith.constant 0 : index
    %c0_45 = arith.constant 0 : index
    %38 = vector.load %arg1[%c0_42, %c2_43, %c0_44, %c0_45] : memref<1x18x18x64xf32, #tpu.memory_space<vmem>>, vector<1x16x16x64xf32>
    %39 = vector.shape_cast %38 : vector<1x16x16x64xf32> to vector<16x16x64xf32>
    %40 = vector.shape_cast %39 : vector<16x16x64xf32> to vector<256x64xf32>
    %c0_46 = arith.constant 0 : index
    %c2_47 = arith.constant 2 : index
    %c1_48 = arith.constant 1 : index
    %c0_49 = arith.constant 0 : index
    %41 = vector.load %arg1[%c0_46, %c2_47, %c1_48, %c0_49] : memref<1x18x18x64xf32, #tpu.memory_space<vmem>>, vector<1x16x16x64xf32>
    %42 = vector.shape_cast %41 : vector<1x16x16x64xf32> to vector<16x16x64xf32>
    %43 = vector.shape_cast %42 : vector<16x16x64xf32> to vector<256x64xf32>
    %c0_50 = arith.constant 0 : index
    %c2_51 = arith.constant 2 : index
    %c2_52 = arith.constant 2 : index
    %c0_53 = arith.constant 0 : index
    %44 = vector.load %arg1[%c0_50, %c2_51, %c2_52, %c0_53] : memref<1x18x18x64xf32, #tpu.memory_space<vmem>>, vector<1x16x16x64xf32>
    %45 = vector.shape_cast %44 : vector<1x16x16x64xf32> to vector<16x16x64xf32>
    %46 = vector.shape_cast %45 : vector<16x16x64xf32> to vector<256x64xf32>
    %47 = tpu.concatenate %31, %34, %37, %40, %43, %46 in 1 : vector<256x64xf32>, vector<256x64xf32>, vector<256x64xf32>, vector<256x64xf32>, vector<256x64xf32>, vector<256x64xf32> -> vector<256x384xf32>
    %48 = arith.truncf %47 : vector<256x384xf32> to vector<256x384xbf16>
    %c1_54 = arith.constant 1 : index
    %c0_55 = arith.constant 0 : index
    %c0_56 = arith.constant 0 : index
    %49 = vector.load %arg2[%c1_54, %c0_55, %c0_56] : memref<2x384x128xbf16, #tpu.memory_space<vmem>>, vector<1x384x128xbf16>
    %50 = vector.shape_cast %49 : vector<1x384x128xbf16> to vector<384x128xbf16>
    %cst_57 = arith.constant dense<0.000000e+00> : vector<256x128xf32>
    %51 = tpu.matmul %48, %50, %cst_57 {dimension_numbers = #tpu.dot_dimension_numbers<[1], [0], [0], [1], [0, 0, 1, 1], [], []>} : vector<256x384xbf16>, vector<384x128xbf16>, vector<256x128xf32> -> vector<256x128xf32>
    %52 = vector.broadcast %0 : vector<1x128xf32> to vector<256x128xf32>
    %53 = arith.addf %51, %52 : vector<256x128xf32>
    %c0_58 = arith.constant 0 : index
    %c1_59 = arith.constant 1 : index
    %c0_60 = arith.constant 0 : index
    %c0_61 = arith.constant 0 : index
    %54 = vector.load %arg4[%c0_58, %c1_59, %c0_60, %c0_61] : memref<1x2x256x128xf32, #tpu.memory_space<vmem>>, vector<1x1x256x128xf32>
    %55 = vector.shape_cast %54 : vector<1x1x256x128xf32> to vector<256x128xf32>
    %56 = vector.shape_cast %53 : vector<256x128xf32> to vector<1x1x256x128xf32>
    tpu.vector_store %arg4[%c0_58, %c1_59, %c0_60, %c0_61], %56 {strides = array<i32>} : memref<1x2x256x128xf32, #tpu.memory_space<vmem>>, vector<1x1x256x128xf32>,
    return
  }
  func.func @transform_0(%arg0: i32) -> (i32, i32, i32, i32) {
    %c0_i32 = arith.constant 0 : i32
    %c0_i32_0 = arith.constant 0 : i32
    %c0_i32_1 = arith.constant 0 : i32
    %c0_i32_2 = arith.constant 0 : i32
    return %arg0, %c0_i32, %c0_i32_0, %c0_i32_1 : i32, i32, i32, i32
  }
  func.func @transform_1(%arg0: i32) -> (i32, i32, i32) {
    %c0_i32 = arith.constant 0 : i32
    %c0_i32_0 = arith.constant 0 : i32
    %c0_i32_1 = arith.constant 0 : i32
    %c0_i32_2 = arith.constant 0 : i32
    return %c0_i32, %c0_i32_0, %c0_i32_1 : i32, i32, i32
  }
  func.func @transform_2(%arg0: i32) -> (i32, i32) {
    %c0_i32 = arith.constant 0 : i32
    %c0_i32_0 = arith.constant 0 : i32
    %c0_i32_1 = arith.constant 0 : i32
    return %c0_i32, %c0_i32_0 : i32, i32
  }
  func.func @transform_3(%arg0: i32) -> (i32, i32, i32, i32) {
    %c0_i32 = arith.constant 0 : i32
    %c0_i32_0 = arith.constant 0 : i32
    %c0_i32_1 = arith.constant 0 : i32
    %c0_i32_2 = arith.constant 0 : i32
    return %arg0, %c0_i32, %c0_i32_0, %c0_i32_1 : i32, i32, i32, i32
  }
}

</mosaic_0001>

<llo_original>
// kernel: tpu_custom_call.1
$region0: #{tpu_custom_call.1}
  #allocation0 [shape = 'u32[]', space=smem, size = 0x4, offset = 0x4, fixed_abs, tag = 'smem constant byte address 0x4 - core index']
  #allocation1 [shape = 'u32[144,128]{1,0:T(1,128)}', space=vmem, size = 0x12000, scoped, tag = 'internal scratch']
  %s0 = inlined_call_operand.vmem [shape: f32[2,18,18,64], index: 0, kind: input, shape index: {}]
  %s1 = inlined_call_operand.vmem [shape: bf16[2,384,128], index: 1, kind: input, shape index: {}]
  %s2 = inlined_call_operand.vmem [shape: f32[1,128], index: 2, kind: input, shape index: {}]
  %s3 = inlined_call_operand.hbm [shape: f32[2,2,256,128], index: 3, kind: output, shape index: {}]
  %s4 = sld [smem:[#allocation0]]
  $region45: #{tpu_custom_call.1} parent=0
    _
  %s6 = ssub.s32 1, %s4
  %s7 = scalar_select 0, %s6, %s4
  $region1: #{tpu_custom_call.1} parent=0
    #allocation2 [shape = 'u8[524288]{0}', space=vmem, size = 0x80000, scoped, tag = 'output window, operand 0']
    #allocation3 [shape = 's32[2]{0}', space=sflag, size = 0x8, scoped, tag = 'scoped memory for tpu_custom_call.1']
    %8 = vsyncpa [#allocation3], 0
    %s9 = scalar_lea.sflag [#allocation3], 1
    %10 = vsyncpa %s9, 0
    loop: start=0, step=1, limit=4
    $region2: #{tpu_custom_call.1} parent=1 // loop_pre_header
      _
    $region3: #{tpu_custom_call.1} parent=1 // loop_header
      %s12 = sphi 0, %s16
      %p13 = scmp.ge.s32.totalorder %s12, 4
      %s22 = sphi 0, %s24
      %s25 = sphi 0, %s22
      %s26 = sphi 0, %s25
      %s42 = sphi 0, %s26
      %s46 = sphi 0, %s46
      %s48 = sphi 0, %s46
      %s49 = sphi 0, %s48
      %s63 = sphi 0, %s49
      %s67 = sphi 0, %s67
      %s69 = sphi 0, %s67
      %s70 = sphi 0, %s69
      %s84 = sphi 0, %s70
      %s90 = sphi 0, %s92
      %s93 = sphi 0, %s90
      %s94 = sphi 0, %s93
      %s110 = sphi 0, %s94
    $region4: #{tpu_custom_call.1} parent=1 // loop_header_branch
      %15 = sbr.rel (%p13) target = $region8
    $region5: #{tpu_custom_call.1} parent=1 // loop_body
      %s17 = ssub.s32 %s12, 1
      %s18 = ssub.s32 %s12, 2
      %s19 = sadd.s32 %s12, 1
      %s20 = ssub.s32 %s12, %s19
      %p21 = scmp.eq.s32.totalorder %s20, 0
      %s23 = sadd.s32 %s22, 1
      %s24 = scalar_select %p21, %s22, %s23
      %p27 = pneg %p21
      %p28 = scmp.eq.s32.totalorder %s12, 1
      %p29 = por %p27, %p28
      %p30 = scmp.ne.s32.totalorder %s22, %s25
      %p31 = scmp.eq.s32.totalorder %s12, 0
      %p32 = por %p30, %p31
      %p33 = scmp.ne.s32.totalorder %s22, %s25
      %p34 = scmp.eq.s32.totalorder %s17, 1
      %p35 = por %p33, %p34
      %p36 = scmp.ne.s32.totalorder %s25, %s26
      %p37 = scmp.eq.s32.totalorder %s17, 0
      %p38 = por %p36, %p37
      %p39 = scmp.ne.s32.totalorder %s25, %s26
      %p40 = scmp.eq.s32.totalorder %s18, 1
      %p41 = por %p39, %p40
      %p43 = scmp.ne.s32.totalorder %s26, %s42
      %p44 = scmp.eq.s32.totalorder %s18, 0
      %p45 = por %p43, %p44
      %s47 = sadd.s32 %s46, 1
      %p50 = scmp.eq.s32.totalorder %s12, 1
      %p51 = scmp.ne.s32.totalorder %s46, %s48
      %p52 = scmp.eq.s32.totalorder %s12, 0
      %p53 = por %p51, %p52
      %p54 = scmp.ne.s32.totalorder %s46, %s48
      %p55 = scmp.eq.s32.totalorder %s17, 1
      %p56 = por %p54, %p55
      %p57 = scmp.ne.s32.totalorder %s48, %s49
      %p58 = scmp.eq.s32.totalorder %s17, 0
      %p59 = por %p57, %p58
      %p60 = scmp.ne.s32.totalorder %s48, %s49
      %p61 = scmp.eq.s32.totalorder %s18, 1
      %p62 = por %p60, %p61
      %p64 = scmp.ne.s32.totalorder %s49, %s63
      %p65 = scmp.eq.s32.totalorder %s18, 0
      %p66 = por %p64, %p65
      %s68 = sadd.s32 %s67, 1
      %p71 = scmp.eq.s32.totalorder %s12, 1
      %p72 = scmp.ne.s32.totalorder %s67, %s69
      %p73 = scmp.eq.s32.totalorder %s12, 0
      %p74 = por %p72, %p73
      %p75 = scmp.ne.s32.totalorder %s67, %s69
      %p76 = scmp.eq.s32.totalorder %s17, 1
      %p77 = por %p75, %p76
      %p78 = scmp.ne.s32.totalorder %s69, %s70
      %p79 = scmp.eq.s32.totalorder %s17, 0
      %p80 = por %p78, %p79
      %p81 = scmp.ne.s32.totalorder %s69, %s70
      %p82 = scmp.eq.s32.totalorder %s18, 1
      %p83 = por %p81, %p82
      %p85 = scmp.ne.s32.totalorder %s70, %s84
      %p86 = scmp.eq.s32.totalorder %s18, 0
      %p87 = por %p85, %p86
      %s88 = ssub.s32 %s12, %s19
      %p89 = scmp.eq.s32.totalorder %s88, 0
      %s91 = sadd.s32 %s90, 1
      %s92 = scalar_select %p89, %s90, %s91
      %p95 = pneg %p89
      %p96 = scmp.eq.s32.totalorder %s12, 1
      %p97 = por %p95, %p96
      %p98 = scmp.ne.s32.totalorder %s90, %s93
      %p99 = scmp.eq.s32.totalorder %s12, 0
      %p100 = por %p98, %p99
      %p101 = scmp.ne.s32.totalorder %s90, %s93
      %p102 = scmp.eq.s32.totalorder %s17, 1
      %p103 = por %p101, %p102
      %p104 = scmp.ne.s32.totalorder %s93, %s94
      %p105 = scmp.eq.s32.totalorder %s17, 0
      %p106 = por %p104, %p105
      %p107 = scmp.ne.s32.totalorder %s93, %s94
      %p108 = scmp.eq.s32.totalorder %s18, 1
      %p109 = por %p107, %p108
      %p111 = scmp.ne.s32.totalorder %s94, %s110
      %p112 = scmp.eq.s32.totalorder %s18, 0
      %p113 = por %p111, %p112
      %p114 = scmp.le.s32.totalorder 1, %s12
      %p115 = scmp.lt.s32.totalorder %s12, 3
      %p116 = pnand %p114, %p115
      %p117 = pneg %p116
      // Predicated region
      $region9: #{tpu_custom_call.1} parent=5 // pred_check
        _
      $region10: #{tpu_custom_call.1} parent=5 // pred_check_branch
        %119 = sbr.rel (%p116) target = $region12
      $region11: #{tpu_custom_call.1} parent=5 // pred_region
        %s120 = ssub.s32 %s12, 1
        // Predicated region
        $region13: #{tpu_custom_call.1} parent=11 // pred_check
          %p121 = pneg %p59
        $region14: #{tpu_custom_call.1} parent=11 // pred_check_branch
          %123 = sbr.rel (%p121) target = $region16
        $region15: #{tpu_custom_call.1} parent=11 // pred_region
          _
        $region16: #{tpu_custom_call.1} parent=11 // pred_fallthru
          _
        // Predicated region
        $region17: #{tpu_custom_call.1} parent=11 // pred_check
          %p124 = pneg %p80
        $region18: #{tpu_custom_call.1} parent=11 // pred_check_branch
          %126 = sbr.rel (%p124) target = $region20
        $region19: #{tpu_custom_call.1} parent=11 // pred_region
          _
        $region20: #{tpu_custom_call.1} parent=11 // pred_fallthru
          _
      $region12: #{tpu_custom_call.1} parent=5 // pred_fallthru
        _
      %p127 = scmp.lt.s32.totalorder %s12, 2
      // Predicated region
      $region21: #{tpu_custom_call.1} parent=5 // pred_check
        %p128 = pneg %p127
      $region22: #{tpu_custom_call.1} parent=5 // pred_check_branch
        %130 = sbr.rel (%p128) target = $region24
      $region23: #{tpu_custom_call.1} parent=5 // pred_region
        // Predicated region
        $region25: #{tpu_custom_call.1} parent=23 // pred_check
          %p131 = pneg %p32
        $region26: #{tpu_custom_call.1} parent=23 // pred_check_branch
          %133 = sbr.rel (%p131) target = $region28
        $region27: #{tpu_custom_call.1} parent=23 // pred_region
          %p134 = scmp.lt.s32.totalorder %s12, 1
          %s135 = scalar_select %p134, %s12, 1
          %s136 = smul.addr %s135, 54
          %s137 = smul.addr %s136, 8
          %s138 = scalar_lea.vmem %s0, %s137
        $region28: #{tpu_custom_call.1} parent=23 // pred_fallthru
          _
      $region24: #{tpu_custom_call.1} parent=5 // pred_fallthru
        _
      %p139 = scmp.le.s32.totalorder 1, %s12
      %p140 = scmp.lt.s32.totalorder %s12, 3
      %p141 = pnand %p139, %p140
      %p142 = pneg %p141
      // Predicated region
      $region29: #{tpu_custom_call.1} parent=5 // pred_check
        _
      $region30: #{tpu_custom_call.1} parent=5 // pred_check_branch
        %144 = sbr.rel (%p141) target = $region32
      $region31: #{tpu_custom_call.1} parent=5 // pred_region
        %s145 = ssub.s32 %s12, 1
        %p146 = scmp.lt.s32.totalorder %s17, 1
        %s147 = scalar_select %p146, %s17, 1
        %s148 = smul.addr %s147, 54
        %s149 = smul.addr %s148, 8
        %s150 = scalar_lea.vmem %s0, %s149
        %p151 = pneg %p38
        %p152 = pneg %p35
        %p153 = pneg %p59
        %p154 = pneg %p56
        %p155 = pneg %p80
        %p156 = pneg %p77
        %p157 = pneg %p106
        %p158 = pneg %p103
        %s159 = sand.u32 %s93, 1
        %s160 = scalar_lea.sflag [#allocation3], %s159
        %s161 = sand.u32 %s93, 1
        %s162 = smul.addr %s161, 512
        %s163 = scalar_lea.vmem [#allocation2], %s162
        %p164 = scmp.lt.s32.totalorder %s17, 1
        %s165 = scalar_select %p164, %s17, 1
        %s166 = smul.addr %s165, 54
        %s167 = smul.addr %s166, 8
        %s168 = scalar_lea.vmem %s0, %s167
        %v170 = vld [vmem:[%s2] sm:$0x1]
        %v171 = vld [vmem:[%s168] sm:$0xff]
        %v172 = vld [vmem:[%s168 + $0x8] sm:$0xff]
        %v173 = vld [vmem:[%s168 + $0x18] sm:$0xff]
        %v174 = vld [vmem:[%s168 + $0x20] sm:$0xff]
        %v175 = vld [vmem:[%s168 + $0x30] sm:$0xff]
        %v176 = vld [vmem:[%s168 + $0x38] sm:$0xff]
        %v177 = vld [vmem:[%s168 + $0x48] sm:$0xff]
        %v178 = vld [vmem:[%s168 + $0x50] sm:$0xff]
        %v179 = vld [vmem:[%s168 + $0x60] sm:$0xff]
        %v180 = vld [vmem:[%s168 + $0x68] sm:$0xff]
        %v181 = vld [vmem:[%s168 + $0x78] sm:$0xff]
        %v182 = vld [vmem:[%s168 + $0x80] sm:$0xff]
        %v183 = vld [vmem:[%s168 + $0x90] sm:$0xff]
        %v184 = vld [vmem:[%s168 + $0x98] sm:$0xff]
        %v185 = vld [vmem:[%s168 + $0xa8] sm:$0xff]
        %v186 = vld [vmem:[%s168 + $0xb0] sm:$0xff]
        %v187 = vld [vmem:[%s168 + $0xc0] sm:$0xff]
        %v188 = vld [vmem:[%s168 + $0xc8] sm:$0xff]
        %v189 = vld [vmem:[%s168 + $0xd8] sm:$0xff]
        %v190 = vld [vmem:[%s168 + $0xe0] sm:$0xff]
        %v191 = vld [vmem:[%s168 + $0xf0] sm:$0xff]
        %v192 = vld [vmem:[%s168 + $0xf8] sm:$0xff]
        %v193 = vld [vmem:[%s168 + $0x108] sm:$0xff]
        %v194 = vld [vmem:[%s168 + $0x110] sm:$0xff]
        %v195 = vld [vmem:[%s168 + $0x120] sm:$0xff]
        %v196 = vld [vmem:[%s168 + $0x128] sm:$0xff]
        %v197 = vld [vmem:[%s168 + $0x138] sm:$0xff]
        %v198 = vld [vmem:[%s168 + $0x140] sm:$0xff]
        %v199 = vld [vmem:[%s168 + $0x150] sm:$0xff]
        %v200 = vld [vmem:[%s168 + $0x158] sm:$0xff]
        %v201 = vld [vmem:[%s168 + $0x168] sm:$0xff]
        %v202 = vld [vmem:[%s168 + $0x170] sm:$0xff]
        %v203 = vld [vmem:[%s168 + $0x1] sm:$0xff]
        %v204 = vld [vmem:[%s168 + $0x9] sm:$0xff]
        %v205 = vld [vmem:[%s168 + $0x19] sm:$0xff]
        %v206 = vld [vmem:[%s168 + $0x21] sm:$0xff]
        %v207 = vld [vmem:[%s168 + $0x31] sm:$0xff]
        %v208 = vld [vmem:[%s168 + $0x39] sm:$0xff]
        %v209 = vld [vmem:[%s168 + $0x49] sm:$0xff]
        %v210 = vld [vmem:[%s168 + $0x51] sm:$0xff]
        %v211 = vld [vmem:[%s168 + $0x61] sm:$0xff]
        %v212 = vld [vmem:[%s168 + $0x69] sm:$0xff]
        %v213 = vld [vmem:[%s168 + $0x79] sm:$0xff]
        %v214 = vld [vmem:[%s168 + $0x81] sm:$0xff]
        %v215 = vld [vmem:[%s168 + $0x91] sm:$0xff]
        %v216 = vld [vmem:[%s168 + $0x99] sm:$0xff]
        %v217 = vld [vmem:[%s168 + $0xa9] sm:$0xff]
        %v218 = vld [vmem:[%s168 + $0xb1] sm:$0xff]
        %v219 = vld [vmem:[%s168 + $0xc1] sm:$0xff]
        %v220 = vld [vmem:[%s168 + $0xc9] sm:$0xff]
        %v221 = vld [vmem:[%s168 + $0xd9] sm:$0xff]
        %v222 = vld [vmem:[%s168 + $0xe1] sm:$0xff]
        %v223 = vld [vmem:[%s168 + $0xf1] sm:$0xff]
        %v224 = vld [vmem:[%s168 + $0xf9] sm:$0xff]
        %v225 = vld [vmem:[%s168 + $0x109] sm:$0xff]
        %v226 = vld [vmem:[%s168 + $0x111] sm:$0xff]
        %v227 = vld [vmem:[%s168 + $0x121] sm:$0xff]
        %v228 = vld [vmem:[%s168 + $0x129] sm:$0xff]
        %v229 = vld [vmem:[%s168 + $0x139] sm:$0xff]
        %v230 = vld [vmem:[%s168 + $0x141] sm:$0xff]
        %v231 = vld [vmem:[%s168 + $0x151] sm:$0xff]
        %v232 = vld [vmem:[%s168 + $0x159] sm:$0xff]
        %v233 = vld [vmem:[%s168 + $0x169] sm:$0xff]
        %v234 = vld [vmem:[%s168 + $0x171] sm:$0xff]
        %v235 = vld [vmem:[%s168 + $0x2] sm:$0xff]
        %v236 = vld [vmem:[%s168 + $0xa] sm:$0xff]
        %v237 = vld [vmem:[%s168 + $0x1a] sm:$0xff]
        %v238 = vld [vmem:[%s168 + $0x22] sm:$0xff]
        %v239 = vld [vmem:[%s168 + $0x32] sm:$0xff]
        %v240 = vld [vmem:[%s168 + $0x3a] sm:$0xff]
        %v241 = vld [vmem:[%s168 + $0x4a] sm:$0xff]
        %v242 = vld [vmem:[%s168 + $0x52] sm:$0xff]
        %v243 = vld [vmem:[%s168 + $0x62] sm:$0xff]
        %v244 = vld [vmem:[%s168 + $0x6a] sm:$0xff]
        %v245 = vld [vmem:[%s168 + $0x7a] sm:$0xff]
        %v246 = vld [vmem:[%s168 + $0x82] sm:$0xff]
        %v247 = vld [vmem:[%s168 + $0x92] sm:$0xff]
        %v248 = vld [vmem:[%s168 + $0x9a] sm:$0xff]
        %v249 = vld [vmem:[%s168 + $0xaa] sm:$0xff]
        %v250 = vld [vmem:[%s168 + $0xb2] sm:$0xff]
        %v251 = vld [vmem:[%s168 + $0xc2] sm:$0xff]
        %v252 = vld [vmem:[%s168 + $0xca] sm:$0xff]
        %v253 = vld [vmem:[%s168 + $0xda] sm:$0xff]
        %v254 = vld [vmem:[%s168 + $0xe2] sm:$0xff]
        %v255 = vld [vmem:[%s168 + $0xf2] sm:$0xff]
        %v256 = vld [vmem:[%s168 + $0xfa] sm:$0xff]
        %v257 = vld [vmem:[%s168 + $0x10a] sm:$0xff]
        %v258 = vld [vmem:[%s168 + $0x112] sm:$0xff]
        %v259 = vld [vmem:[%s168 + $0x122] sm:$0xff]
        %v260 = vld [vmem:[%s168 + $0x12a] sm:$0xff]
        %v261 = vld [vmem:[%s168 + $0x13a] sm:$0xff]
        %v262 = vld [vmem:[%s168 + $0x142] sm:$0xff]
        %v263 = vld [vmem:[%s168 + $0x152] sm:$0xff]
        %v264 = vld [vmem:[%s168 + $0x15a] sm:$0xff]
        %v265 = vld [vmem:[%s168 + $0x16a] sm:$0xff]
        %v266 = vld [vmem:[%s168 + $0x172] sm:$0xff]
        %s267 = scalar_lea.vmem %s168, 24
        %v268 = vld [vmem:[%s267] sm:$0xff]
        %v269 = vld [vmem:[%s267 + $0x8] sm:$0xff]
        %v270 = vld [vmem:[%s267 + $0x18] sm:$0xff]
        %v271 = vld [vmem:[%s267 + $0x20] sm:$0xff]
        %v272 = vld [vmem:[%s267 + $0x30] sm:$0xff]
        %v273 = vld [vmem:[%s267 + $0x38] sm:$0xff]
        %v274 = vld [vmem:[%s267 + $0x48] sm:$0xff]
        %v275 = vld [vmem:[%s267 + $0x50] sm:$0xff]
        %v276 = vld [vmem:[%s267 + $0x60] sm:$0xff]
        %v277 = vld [vmem:[%s267 + $0x68] sm:$0xff]
        %v278 = vld [vmem:[%s267 + $0x78] sm:$0xff]
        %v279 = vld [vmem:[%s267 + $0x80] sm:$0xff]
        %v280 = vld [vmem:[%s267 + $0x90] sm:$0xff]
        %v281 = vld [vmem:[%s267 + $0x98] sm:$0xff]
        %v282 = vld [vmem:[%s267 + $0xa8] sm:$0xff]
        %v283 = vld [vmem:[%s267 + $0xb0] sm:$0xff]
        %v284 = vld [vmem:[%s267 + $0xc0] sm:$0xff]
        %v285 = vld [vmem:[%s267 + $0xc8] sm:$0xff]
        %v286 = vld [vmem:[%s267 + $0xd8] sm:$0xff]
        %v287 = vld [vmem:[%s267 + $0xe0] sm:$0xff]
        %v288 = vld [vmem:[%s267 + $0xf0] sm:$0xff]
        %v289 = vld [vmem:[%s267 + $0xf8] sm:$0xff]
        %v290 = vld [vmem:[%s267 + $0x108] sm:$0xff]
        %v291 = vld [vmem:[%s267 + $0x110] sm:$0xff]
        %v292 = vld [vmem:[%s267 + $0x120] sm:$0xff]
        %v293 = vld [vmem:[%s267 + $0x128] sm:$0xff]
        %v294 = vld [vmem:[%s267 + $0x138] sm:$0xff]
        %v295 = vld [vmem:[%s267 + $0x140] sm:$0xff]
        %v296 = vld [vmem:[%s267 + $0x150] sm:$0xff]
        %v297 = vld [vmem:[%s267 + $0x158] sm:$0xff]
        %v298 = vld [vmem:[%s267 + $0x168] sm:$0xff]
        %v299 = vld [vmem:[%s267 + $0x170] sm:$0xff]
        %v300 = vld [vmem:[%s267 + $0x1] sm:$0xff]
        %v301 = vld [vmem:[%s267 + $0x9] sm:$0xff]
        %v302 = vld [vmem:[%s267 + $0x19] sm:$0xff]
        %v303 = vld [vmem:[%s267 + $0x21] sm:$0xff]
        %v304 = vld [vmem:[%s267 + $0x31] sm:$0xff]
        %v305 = vld [vmem:[%s267 + $0x39] sm:$0xff]
        %v306 = vld [vmem:[%s267 + $0x49] sm:$0xff]
        %v307 = vld [vmem:[%s267 + $0x51] sm:$0xff]
        %v308 = vld [vmem:[%s267 + $0x61] sm:$0xff]
        %v309 = vld [vmem:[%s267 + $0x69] sm:$0xff]
        %v310 = vld [vmem:[%s267 + $0x79] sm:$0xff]
        %v311 = vld [vmem:[%s267 + $0x81] sm:$0xff]
        %v312 = vld [vmem:[%s267 + $0x91] sm:$0xff]
        %v313 = vld [vmem:[%s267 + $0x99] sm:$0xff]
        %v314 = vld [vmem:[%s267 + $0xa9] sm:$0xff]
        %v315 = vld [vmem:[%s267 + $0xb1] sm:$0xff]
        %v316 = vld [vmem:[%s267 + $0xc1] sm:$0xff]
        %v317 = vld [vmem:[%s267 + $0xc9] sm:$0xff]
        %v318 = vld [vmem:[%s267 + $0xd9] sm:$0xff]
        %v319 = vld [vmem:[%s267 + $0xe1] sm:$0xff]
        %v320 = vld [vmem:[%s267 + $0xf1] sm:$0xff]
        %v321 = vld [vmem:[%s267 + $0xf9] sm:$0xff]
        %v322 = vld [vmem:[%s267 + $0x109] sm:$0xff]
        %v323 = vld [vmem:[%s267 + $0x111] sm:$0xff]
        %v324 = vld [vmem:[%s267 + $0x121] sm:$0xff]
        %v325 = vld [vmem:[%s267 + $0x129] sm:$0xff]
        %v326 = vld [vmem:[%s267 + $0x139] sm:$0xff]
        %v327 = vld [vmem:[%s267 + $0x141] sm:$0xff]
        %v328 = vld [vmem:[%s267 + $0x151] sm:$0xff]
        %v329 = vld [vmem:[%s267 + $0x159] sm:$0xff]
        %v330 = vld [vmem:[%s267 + $0x169] sm:$0xff]
        %v331 = vld [vmem:[%s267 + $0x171] sm:$0xff]
        %v332 = vld [vmem:[%s267 + $0x2] sm:$0xff]
        %v333 = vld [vmem:[%s267 + $0xa] sm:$0xff]
        %v334 = vld [vmem:[%s267 + $0x1a] sm:$0xff]
        %v335 = vld [vmem:[%s267 + $0x22] sm:$0xff]
        %v336 = vld [vmem:[%s267 + $0x32] sm:$0xff]
        %v337 = vld [vmem:[%s267 + $0x3a] sm:$0xff]
        %v338 = vld [vmem:[%s267 + $0x4a] sm:$0xff]
        %v339 = vld [vmem:[%s267 + $0x52] sm:$0xff]
        %v340 = vld [vmem:[%s267 + $0x62] sm:$0xff]
        %v341 = vld [vmem:[%s267 + $0x6a] sm:$0xff]
        %v342 = vld [vmem:[%s267 + $0x7a] sm:$0xff]
        %v343 = vld [vmem:[%s267 + $0x82] sm:$0xff]
        %v344 = vld [vmem:[%s267 + $0x92] sm:$0xff]
        %v345 = vld [vmem:[%s267 + $0x9a] sm:$0xff]
        %v346 = vld [vmem:[%s267 + $0xaa] sm:$0xff]
        %v347 = vld [vmem:[%s267 + $0xb2] sm:$0xff]
        %v348 = vld [vmem:[%s267 + $0xc2] sm:$0xff]
        %v349 = vld [vmem:[%s267 + $0xca] sm:$0xff]
        %v350 = vld [vmem:[%s267 + $0xda] sm:$0xff]
        %v351 = vld [vmem:[%s267 + $0xe2] sm:$0xff]
        %v352 = vld [vmem:[%s267 + $0xf2] sm:$0xff]
        %v353 = vld [vmem:[%s267 + $0xfa] sm:$0xff]
        %v354 = vld [vmem:[%s267 + $0x10a] sm:$0xff]
        %v355 = vld [vmem:[%s267 + $0x112] sm:$0xff]
        %v356 = vld [vmem:[%s267 + $0x122] sm:$0xff]
        %v357 = vld [vmem:[%s267 + $0x12a] sm:$0xff]
        %v358 = vld [vmem:[%s267 + $0x13a] sm:$0xff]
        %v359 = vld [vmem:[%s267 + $0x142] sm:$0xff]
        %v360 = vld [vmem:[%s267 + $0x152] sm:$0xff]
        %v361 = vld [vmem:[%s267 + $0x15a] sm:$0xff]
        %v362 = vld [vmem:[%s267 + $0x16a] sm:$0xff]
        %v363 = vld [vmem:[%s267 + $0x172] sm:$0xff]
        %396 = vrot.lane.b32.xlu0 %v203, 64
        %v397 = vpop.permute.xlu0 %396
        %398 = vrot.lane.b32.xlu0 %v204, 64
        %v399 = vpop.permute.xlu0 %398
        %400 = vrot.lane.b32.xlu0 %v205, 64
        %v401 = vpop.permute.xlu0 %400
        %402 = vrot.lane.b32.xlu0 %v206, 64
        %v403 = vpop.permute.xlu0 %402
        %404 = vrot.lane.b32.xlu0 %v207, 64
        %v405 = vpop.permute.xlu0 %404
        %406 = vrot.lane.b32.xlu0 %v208, 64
        %v407 = vpop.permute.xlu0 %406
        %408 = vrot.lane.b32.xlu0 %v209, 64
        %v409 = vpop.permute.xlu0 %408
        %410 = vrot.lane.b32.xlu0 %v210, 64
        %v411 = vpop.permute.xlu0 %410
        %412 = vrot.lane.b32.xlu0 %v211, 64
        %v413 = vpop.permute.xlu0 %412
        %414 = vrot.lane.b32.xlu0 %v212, 64
        %v415 = vpop.permute.xlu0 %414
        %416 = vrot.lane.b32.xlu0 %v213, 64
        %v417 = vpop.permute.xlu0 %416
        %418 = vrot.lane.b32.xlu0 %v214, 64
        %v419 = vpop.permute.xlu0 %418
        %420 = vrot.lane.b32.xlu0 %v215, 64
        %v421 = vpop.permute.xlu0 %420
        %422 = vrot.lane.b32.xlu0 %v216, 64
        %v423 = vpop.permute.xlu0 %422
        %424 = vrot.lane.b32.xlu0 %v217, 64
        %v425 = vpop.permute.xlu0 %424
        %426 = vrot.lane.b32.xlu0 %v218, 64
        %v427 = vpop.permute.xlu0 %426
        %428 = vrot.lane.b32.xlu0 %v219, 64
        %v429 = vpop.permute.xlu0 %428
        %430 = vrot.lane.b32.xlu0 %v220, 64
        %v431 = vpop.permute.xlu0 %430
        %432 = vrot.lane.b32.xlu0 %v221, 64
        %v433 = vpop.permute.xlu0 %432
        %434 = vrot.lane.b32.xlu0 %v222, 64
        %v435 = vpop.permute.xlu0 %434
        %436 = vrot.lane.b32.xlu0 %v223, 64
        %v437 = vpop.permute.xlu0 %436
        %438 = vrot.lane.b32.xlu0 %v224, 64
        %v439 = vpop.permute.xlu0 %438
        %440 = vrot.lane.b32.xlu0 %v225, 64
        %v441 = vpop.permute.xlu0 %440
        %442 = vrot.lane.b32.xlu0 %v226, 64
        %v443 = vpop.permute.xlu0 %442
        %444 = vrot.lane.b32.xlu0 %v227, 64
        %v445 = vpop.permute.xlu0 %444
        %446 = vrot.lane.b32.xlu0 %v228, 64
        %v447 = vpop.permute.xlu0 %446
        %448 = vrot.lane.b32.xlu0 %v229, 64
        %v449 = vpop.permute.xlu0 %448
        %450 = vrot.lane.b32.xlu0 %v230, 64
        %v451 = vpop.permute.xlu0 %450
        %452 = vrot.lane.b32.xlu0 %v231, 64
        %v453 = vpop.permute.xlu0 %452
        %454 = vrot.lane.b32.xlu0 %v232, 64
        %v455 = vpop.permute.xlu0 %454
        %456 = vrot.lane.b32.xlu0 %v233, 64
        %v457 = vpop.permute.xlu0 %456
        %458 = vrot.lane.b32.xlu0 %v234, 64
        %v459 = vpop.permute.xlu0 %458
        %524 = vrot.lane.b32.xlu0 %v268, 64
        %v525 = vpop.permute.xlu0 %524
        %526 = vrot.lane.b32.xlu0 %v269, 64
        %v527 = vpop.permute.xlu0 %526
        %528 = vrot.lane.b32.xlu0 %v270, 64
        %v529 = vpop.permute.xlu0 %528
        %530 = vrot.lane.b32.xlu0 %v271, 64
        %v531 = vpop.permute.xlu0 %530
        %532 = vrot.lane.b32.xlu0 %v272, 64
        %v533 = vpop.permute.xlu0 %532
        %534 = vrot.lane.b32.xlu0 %v273, 64
        %v535 = vpop.permute.xlu0 %534
        %536 = vrot.lane.b32.xlu0 %v274, 64
        %v537 = vpop.permute.xlu0 %536
        %538 = vrot.lane.b32.xlu0 %v275, 64
        %v539 = vpop.permute.xlu0 %538
        %540 = vrot.lane.b32.xlu0 %v276, 64
        %v541 = vpop.permute.xlu0 %540
        %542 = vrot.lane.b32.xlu0 %v277, 64
        %v543 = vpop.permute.xlu0 %542
        %544 = vrot.lane.b32.xlu0 %v278, 64
        %v545 = vpop.permute.xlu0 %544
        %546 = vrot.lane.b32.xlu0 %v279, 64
        %v547 = vpop.permute.xlu0 %546
        %548 = vrot.lane.b32.xlu0 %v280, 64
        %v549 = vpop.permute.xlu0 %548
        %550 = vrot.lane.b32.xlu0 %v281, 64
        %v551 = vpop.permute.xlu0 %550
        %552 = vrot.lane.b32.xlu0 %v282, 64
        %v553 = vpop.permute.xlu0 %552
        %554 = vrot.lane.b32.xlu0 %v283, 64
        %v555 = vpop.permute.xlu0 %554
        %556 = vrot.lane.b32.xlu0 %v284, 64
        %v557 = vpop.permute.xlu0 %556
        %558 = vrot.lane.b32.xlu0 %v285, 64
        %v559 = vpop.permute.xlu0 %558
        %560 = vrot.lane.b32.xlu0 %v286, 64
        %v561 = vpop.permute.xlu0 %560
        %562 = vrot.lane.b32.xlu0 %v287, 64
        %v563 = vpop.permute.xlu0 %562
        %564 = vrot.lane.b32.xlu0 %v288, 64
        %v565 = vpop.permute.xlu0 %564
        %566 = vrot.lane.b32.xlu0 %v289, 64
        %v567 = vpop.permute.xlu0 %566
        %568 = vrot.lane.b32.xlu0 %v290, 64
        %v569 = vpop.permute.xlu0 %568
        %570 = vrot.lane.b32.xlu0 %v291, 64
        %v571 = vpop.permute.xlu0 %570
        %572 = vrot.lane.b32.xlu0 %v292, 64
        %v573 = vpop.permute.xlu0 %572
        %574 = vrot.lane.b32.xlu0 %v293, 64
        %v575 = vpop.permute.xlu0 %574
        %576 = vrot.lane.b32.xlu0 %v294, 64
        %v577 = vpop.permute.xlu0 %576
        %578 = vrot.lane.b32.xlu0 %v295, 64
        %v579 = vpop.permute.xlu0 %578
        %580 = vrot.lane.b32.xlu0 %v296, 64
        %v581 = vpop.permute.xlu0 %580
        %582 = vrot.lane.b32.xlu0 %v297, 64
        %v583 = vpop.permute.xlu0 %582
        %584 = vrot.lane.b32.xlu0 %v298, 64
        %v585 = vpop.permute.xlu0 %584
        %586 = vrot.lane.b32.xlu0 %v299, 64
        %v587 = vpop.permute.xlu0 %586
        %652 = vrot.lane.b32.xlu0 %v332, 64
        %v653 = vpop.permute.xlu0 %652
        %654 = vrot.lane.b32.xlu0 %v333, 64
        %v655 = vpop.permute.xlu0 %654
        %656 = vrot.lane.b32.xlu0 %v334, 64
        %v657 = vpop.permute.xlu0 %656
        %658 = vrot.lane.b32.xlu0 %v335, 64
        %v659 = vpop.permute.xlu0 %658
        %660 = vrot.lane.b32.xlu0 %v336, 64
        %v661 = vpop.permute.xlu0 %660
        %662 = vrot.lane.b32.xlu0 %v337, 64
        %v663 = vpop.permute.xlu0 %662
        %664 = vrot.lane.b32.xlu0 %v338, 64
        %v665 = vpop.permute.xlu0 %664
        %666 = vrot.lane.b32.xlu0 %v339, 64
        %v667 = vpop.permute.xlu0 %666
        %668 = vrot.lane.b32.xlu0 %v340, 64
        %v669 = vpop.permute.xlu0 %668
        %670 = vrot.lane.b32.xlu0 %v341, 64
        %v671 = vpop.permute.xlu0 %670
        %672 = vrot.lane.b32.xlu0 %v342, 64
        %v673 = vpop.permute.xlu0 %672
        %674 = vrot.lane.b32.xlu0 %v343, 64
        %v675 = vpop.permute.xlu0 %674
        %676 = vrot.lane.b32.xlu0 %v344, 64
        %v677 = vpop.permute.xlu0 %676
        %678 = vrot.lane.b32.xlu0 %v345, 64
        %v679 = vpop.permute.xlu0 %678
        %680 = vrot.lane.b32.xlu0 %v346, 64
        %v681 = vpop.permute.xlu0 %680
        %682 = vrot.lane.b32.xlu0 %v347, 64
        %v683 = vpop.permute.xlu0 %682
        %684 = vrot.lane.b32.xlu0 %v348, 64
        %v685 = vpop.permute.xlu0 %684
        %686 = vrot.lane.b32.xlu0 %v349, 64
        %v687 = vpop.permute.xlu0 %686
        %688 = vrot.lane.b32.xlu0 %v350, 64
        %v689 = vpop.permute.xlu0 %688
        %690 = vrot.lane.b32.xlu0 %v351, 64
        %v691 = vpop.permute.xlu0 %690
        %692 = vrot.lane.b32.xlu0 %v352, 64
        %v693 = vpop.permute.xlu0 %692
        %694 = vrot.lane.b32.xlu0 %v353, 64
        %v695 = vpop.permute.xlu0 %694
        %696 = vrot.lane.b32.xlu0 %v354, 64
        %v697 = vpop.permute.xlu0 %696
        %698 = vrot.lane.b32.xlu0 %v355, 64
        %v699 = vpop.permute.xlu0 %698
        %700 = vrot.lane.b32.xlu0 %v356, 64
        %v701 = vpop.permute.xlu0 %700
        %702 = vrot.lane.b32.xlu0 %v357, 64
        %v703 = vpop.permute.xlu0 %702
        %704 = vrot.lane.b32.xlu0 %v358, 64
        %v705 = vpop.permute.xlu0 %704
        %706 = vrot.lane.b32.xlu0 %v359, 64
        %v707 = vpop.permute.xlu0 %706
        %708 = vrot.lane.b32.xlu0 %v360, 64
        %v709 = vpop.permute.xlu0 %708
        %710 = vrot.lane.b32.xlu0 %v361, 64
        %v711 = vpop.permute.xlu0 %710
        %712 = vrot.lane.b32.xlu0 %v362, 64
        %v713 = vpop.permute.xlu0 %712
        %714 = vrot.lane.b32.xlu0 %v363, 64
        %v715 = vpop.permute.xlu0 %714
        %vm748 = vcmask 523264
        %v749 = vsel %vm748, %v171, %v397
        %v750 = vsel %vm748, %v172, %v399
        %v751 = vsel %vm748, %v173, %v401
        %v752 = vsel %vm748, %v174, %v403
        %v753 = vsel %vm748, %v175, %v405
        %v754 = vsel %vm748, %v176, %v407
        %v755 = vsel %vm748, %v177, %v409
        %v756 = vsel %vm748, %v178, %v411
        %v757 = vsel %vm748, %v179, %v413
        %v758 = vsel %vm748, %v180, %v415
        %v759 = vsel %vm748, %v181, %v417
        %v760 = vsel %vm748, %v182, %v419
        %v761 = vsel %vm748, %v183, %v421
        %v762 = vsel %vm748, %v184, %v423
        %v763 = vsel %vm748, %v185, %v425
        %v764 = vsel %vm748, %v186, %v427
        %v765 = vsel %vm748, %v187, %v429
        %v766 = vsel %vm748, %v188, %v431
        %v767 = vsel %vm748, %v189, %v433
        %v768 = vsel %vm748, %v190, %v435
        %v769 = vsel %vm748, %v191, %v437
        %v770 = vsel %vm748, %v192, %v439
        %v771 = vsel %vm748, %v193, %v441
        %v772 = vsel %vm748, %v194, %v443
        %v773 = vsel %vm748, %v195, %v445
        %v774 = vsel %vm748, %v196, %v447
        %v775 = vsel %vm748, %v197, %v449
        %v776 = vsel %vm748, %v198, %v451
        %v777 = vsel %vm748, %v199, %v453
        %v778 = vsel %vm748, %v200, %v455
        %v779 = vsel %vm748, %v201, %v457
        %v780 = vsel %vm748, %v202, %v459
        %v781 = vsel %vm748, %v235, %v525
        %v782 = vsel %vm748, %v236, %v527
        %v783 = vsel %vm748, %v237, %v529
        %v784 = vsel %vm748, %v238, %v531
        %v785 = vsel %vm748, %v239, %v533
        %v786 = vsel %vm748, %v240, %v535
        %v787 = vsel %vm748, %v241, %v537
        %v788 = vsel %vm748, %v242, %v539
        %v789 = vsel %vm748, %v243, %v541
        %v790 = vsel %vm748, %v244, %v543
        %v791 = vsel %vm748, %v245, %v545
        %v792 = vsel %vm748, %v246, %v547
        %v793 = vsel %vm748, %v247, %v549
        %v794 = vsel %vm748, %v248, %v551
        %v795 = vsel %vm748, %v249, %v553
        %v796 = vsel %vm748, %v250, %v555
        %v797 = vsel %vm748, %v251, %v557
        %v798 = vsel %vm748, %v252, %v559
        %v799 = vsel %vm748, %v253, %v561
        %v800 = vsel %vm748, %v254, %v563
        %v801 = vsel %vm748, %v255, %v565
        %v802 = vsel %vm748, %v256, %v567
        %v803 = vsel %vm748, %v257, %v569
        %v804 = vsel %vm748, %v258, %v571
        %v805 = vsel %vm748, %v259, %v573
        %v806 = vsel %vm748, %v260, %v575
        %v807 = vsel %vm748, %v261, %v577
        %v808 = vsel %vm748, %v262, %v579
        %v809 = vsel %vm748, %v263, %v581
        %v810 = vsel %vm748, %v264, %v583
        %v811 = vsel %vm748, %v265, %v585
        %v812 = vsel %vm748, %v266, %v587
        %v813 = vsel %vm748, %v300, %v653
        %v814 = vsel %vm748, %v301, %v655
        %v815 = vsel %vm748, %v302, %v657
        %v816 = vsel %vm748, %v303, %v659
        %v817 = vsel %vm748, %v304, %v661
        %v818 = vsel %vm748, %v305, %v663
        %v819 = vsel %vm748, %v306, %v665
        %v820 = vsel %vm748, %v307, %v667
        %v821 = vsel %vm748, %v308, %v669
        %v822 = vsel %vm748, %v309, %v671
        %v823 = vsel %vm748, %v310, %v673
        %v824 = vsel %vm748, %v311, %v675
        %v825 = vsel %vm748, %v312, %v677
        %v826 = vsel %vm748, %v313, %v679
        %v827 = vsel %vm748, %v314, %v681
        %v828 = vsel %vm748, %v315, %v683
        %v829 = vsel %vm748, %v316, %v685
        %v830 = vsel %vm748, %v317, %v687
        %v831 = vsel %vm748, %v318, %v689
        %v832 = vsel %vm748, %v319, %v691
        %v833 = vsel %vm748, %v320, %v693
        %v834 = vsel %vm748, %v321, %v695
        %v835 = vsel %vm748, %v322, %v697
        %v836 = vsel %vm748, %v323, %v699
        %v837 = vsel %vm748, %v324, %v701
        %v838 = vsel %vm748, %v325, %v703
        %v839 = vsel %vm748, %v326, %v705
        %v840 = vsel %vm748, %v327, %v707
        %v841 = vsel %vm748, %v328, %v709
        %v842 = vsel %vm748, %v329, %v711
        %v843 = vsel %vm748, %v330, %v713
        %v844 = vsel %vm748, %v331, %v715
        %v845 = vpack.c.bf16 %v750, %v749
        %v846 = vpack.c.bf16 %v782, %v781
        %v847 = vpack.c.bf16 %v814, %v813
        %v848 = vpack.c.bf16 %v752, %v751
        %v849 = vpack.c.bf16 %v784, %v783
        %v850 = vpack.c.bf16 %v816, %v815
        %v851 = vpack.c.bf16 %v754, %v753
        %v852 = vpack.c.bf16 %v786, %v785
        %v853 = vpack.c.bf16 %v818, %v817
        %v854 = vpack.c.bf16 %v756, %v755
        %v855 = vpack.c.bf16 %v788, %v787
        %v856 = vpack.c.bf16 %v820, %v819
        %v857 = vpack.c.bf16 %v758, %v757
        %v858 = vpack.c.bf16 %v790, %v789
        %v859 = vpack.c.bf16 %v822, %v821
        %v860 = vpack.c.bf16 %v760, %v759
        %v861 = vpack.c.bf16 %v792, %v791
        %v862 = vpack.c.bf16 %v824, %v823
        %v863 = vpack.c.bf16 %v762, %v761
        %v864 = vpack.c.bf16 %v794, %v793
        %v865 = vpack.c.bf16 %v826, %v825
        %v866 = vpack.c.bf16 %v764, %v763
        %v867 = vpack.c.bf16 %v796, %v795
        %v868 = vpack.c.bf16 %v828, %v827
        %v869 = vpack.c.bf16 %v766, %v765
        %v870 = vpack.c.bf16 %v798, %v797
        %v871 = vpack.c.bf16 %v830, %v829
        %v872 = vpack.c.bf16 %v768, %v767
        %v873 = vpack.c.bf16 %v800, %v799
        %v874 = vpack.c.bf16 %v832, %v831
        %v875 = vpack.c.bf16 %v770, %v769
        %v876 = vpack.c.bf16 %v802, %v801
        %v877 = vpack.c.bf16 %v834, %v833
        %v878 = vpack.c.bf16 %v772, %v771
        %v879 = vpack.c.bf16 %v804, %v803
        %v880 = vpack.c.bf16 %v836, %v835
        %v881 = vpack.c.bf16 %v774, %v773
        %v882 = vpack.c.bf16 %v806, %v805
        %v883 = vpack.c.bf16 %v838, %v837
        %v884 = vpack.c.bf16 %v776, %v775
        %v885 = vpack.c.bf16 %v808, %v807
        %v886 = vpack.c.bf16 %v840, %v839
        %v887 = vpack.c.bf16 %v778, %v777
        %v888 = vpack.c.bf16 %v810, %v809
        %v889 = vpack.c.bf16 %v842, %v841
        %v890 = vpack.c.bf16 %v780, %v779
        %v891 = vpack.c.bf16 %v812, %v811
        %v892 = vpack.c.bf16 %v844, %v843
        %v893 = vld [vmem:[%s1] sm:$0xf]
        %v894 = vld [vmem:[%s1 + $0x4] sm:$0xf]
        %v895 = vld [vmem:[%s1 + $0x8] sm:$0xf]
        %v896 = vld [vmem:[%s1 + $0xc] sm:$0xf]
        %v897 = vld [vmem:[%s1 + $0x10] sm:$0xf]
        %v898 = vld [vmem:[%s1 + $0x14] sm:$0xf]
        %v899 = vld [vmem:[%s1 + $0x18] sm:$0xf]
        %v900 = vld [vmem:[%s1 + $0x1c] sm:$0xf]
        %v901 = vld [vmem:[%s1 + $0x20] sm:$0xf]
        %v902 = vld [vmem:[%s1 + $0x24] sm:$0xf]
        %v903 = vld [vmem:[%s1 + $0x28] sm:$0xf]
        %v904 = vld [vmem:[%s1 + $0x2c] sm:$0xf]
        %v905 = vld [vmem:[%s1 + $0x30] sm:$0xf]
        %v906 = vld [vmem:[%s1 + $0x34] sm:$0xf]
        %v907 = vld [vmem:[%s1 + $0x38] sm:$0xf]
        %v908 = vld [vmem:[%s1 + $0x3c] sm:$0xf]
        %v909 = vld [vmem:[%s1 + $0x40] sm:$0xf]
        %v910 = vld [vmem:[%s1 + $0x44] sm:$0xf]
        %v911 = vld [vmem:[%s1 + $0x48] sm:$0xf]
        %v912 = vld [vmem:[%s1 + $0x4c] sm:$0xf]
        %v913 = vld [vmem:[%s1 + $0x50] sm:$0xf]
        %v914 = vld [vmem:[%s1 + $0x54] sm:$0xf]
        %v915 = vld [vmem:[%s1 + $0x58] sm:$0xf]
        %v916 = vld [vmem:[%s1 + $0x5c] sm:$0xf]
        %v917 = vld [vmem:[%s1 + $0x60] sm:$0xf]
        %v918 = vld [vmem:[%s1 + $0x64] sm:$0xf]
        %v919 = vld [vmem:[%s1 + $0x68] sm:$0xf]
        %v920 = vld [vmem:[%s1 + $0x6c] sm:$0xf]
        %v921 = vld [vmem:[%s1 + $0x70] sm:$0xf]
        %v922 = vld [vmem:[%s1 + $0x74] sm:$0xf]
        %v923 = vld [vmem:[%s1 + $0x78] sm:$0xf]
        %v924 = vld [vmem:[%s1 + $0x7c] sm:$0xf]
        %v925 = vld [vmem:[%s1 + $0x80] sm:$0xf]
        %v926 = vld [vmem:[%s1 + $0x84] sm:$0xf]
        %v927 = vld [vmem:[%s1 + $0x88] sm:$0xf]
        %v928 = vld [vmem:[%s1 + $0x8c] sm:$0xf]
        %v929 = vld [vmem:[%s1 + $0x90] sm:$0xf]
        %v930 = vld [vmem:[%s1 + $0x94] sm:$0xf]
        %v931 = vld [vmem:[%s1 + $0x98] sm:$0xf]
        %v932 = vld [vmem:[%s1 + $0x9c] sm:$0xf]
        %v933 = vld [vmem:[%s1 + $0xa0] sm:$0xf]
        %v934 = vld [vmem:[%s1 + $0xa4] sm:$0xf]
        %v935 = vld [vmem:[%s1 + $0xa8] sm:$0xf]
        %v936 = vld [vmem:[%s1 + $0xac] sm:$0xf]
        %v937 = vld [vmem:[%s1 + $0xb0] sm:$0xf]
        %v938 = vld [vmem:[%s1 + $0xb4] sm:$0xf]
        %v939 = vld [vmem:[%s1 + $0xb8] sm:$0xf]
        %v940 = vld [vmem:[%s1 + $0xbc] sm:$0xf]
        %v942 = vlaneseq
        %v943 = vshrl.u32 %v942, 7
        %v944 = vsub.s32 0, %v943
        %v945 = vrot.slane %v170, %v944
        %v995 = vunpack.c.l.b16 %v893
        %v996 = vunpack.c.l.b16 %v894
        %v997 = vunpack.c.l.b16 %v895
        %v998 = vunpack.c.l.b16 %v896
        %v999 = vunpack.c.l.b16 %v897
        %v1000 = vunpack.c.l.b16 %v898
        %v1001 = vunpack.c.l.b16 %v899
        %v1002 = vunpack.c.l.b16 %v900
        %v1003 = vunpack.c.l.b16 %v901
        %v1004 = vunpack.c.l.b16 %v902
        %v1005 = vunpack.c.l.b16 %v903
        %v1006 = vunpack.c.l.b16 %v904
        %v1007 = vunpack.c.l.b16 %v905
        %v1008 = vunpack.c.l.b16 %v906
        %v1009 = vunpack.c.l.b16 %v907
        %v1010 = vunpack.c.l.b16 %v908
        %v1011 = vunpack.c.l.b16 %v909
        %v1012 = vunpack.c.l.b16 %v910
        %v1013 = vunpack.c.l.b16 %v911
        %v1014 = vunpack.c.l.b16 %v912
        %v1015 = vunpack.c.l.b16 %v913
        %v1016 = vunpack.c.l.b16 %v914
        %v1017 = vunpack.c.l.b16 %v915
        %v1018 = vunpack.c.l.b16 %v916
        %v1019 = vunpack.c.l.b16 %v917
        %v1020 = vunpack.c.l.b16 %v918
        %v1021 = vunpack.c.l.b16 %v919
        %v1022 = vunpack.c.l.b16 %v920
        %v1023 = vunpack.c.l.b16 %v921
        %v1024 = vunpack.c.l.b16 %v922
        %v1025 = vunpack.c.l.b16 %v923
        %v1026 = vunpack.c.l.b16 %v924
        %v1027 = vunpack.c.l.b16 %v925
        %v1028 = vunpack.c.l.b16 %v926
        %v1029 = vunpack.c.l.b16 %v927
        %v1030 = vunpack.c.l.b16 %v928
        %v1031 = vunpack.c.l.b16 %v929
        %v1032 = vunpack.c.l.b16 %v930
        %v1033 = vunpack.c.l.b16 %v931
        %v1034 = vunpack.c.l.b16 %v932
        %v1035 = vunpack.c.l.b16 %v933
        %v1036 = vunpack.c.l.b16 %v934
        %v1037 = vunpack.c.l.b16 %v935
        %v1038 = vunpack.c.l.b16 %v936
        %v1039 = vunpack.c.l.b16 %v937
        %v1040 = vunpack.c.l.b16 %v938
        %v1041 = vunpack.c.l.b16 %v939
        %v1042 = vunpack.c.l.b16 %v940
        %v1043 = vpack.c.b16 %v996, %v995
        %v1044 = vpack.c.b16 %v998, %v997
        %v1045 = vpack.c.b16 %v1000, %v999
        %v1046 = vpack.c.b16 %v1002, %v1001
        %v1047 = vpack.c.b16 %v1004, %v1003
        %v1048 = vpack.c.b16 %v1006, %v1005
        %v1049 = vpack.c.b16 %v1008, %v1007
        %v1050 = vpack.c.b16 %v1010, %v1009
        %v1051 = vpack.c.b16 %v1012, %v1011
        %v1052 = vpack.c.b16 %v1014, %v1013
        %v1053 = vpack.c.b16 %v1016, %v1015
        %v1054 = vpack.c.b16 %v1018, %v1017
        %v1055 = vpack.c.b16 %v1020, %v1019
        %v1056 = vpack.c.b16 %v1022, %v1021
        %v1057 = vpack.c.b16 %v1024, %v1023
        %v1058 = vpack.c.b16 %v1026, %v1025
        %v1059 = vpack.c.b16 %v1028, %v1027
        %v1060 = vpack.c.b16 %v1030, %v1029
        %v1061 = vpack.c.b16 %v1032, %v1031
        %v1062 = vpack.c.b16 %v1034, %v1033
        %v1063 = vpack.c.b16 %v1036, %v1035
        %v1064 = vpack.c.b16 %v1038, %v1037
        %v1065 = vpack.c.b16 %v1040, %v1039
        %v1066 = vpack.c.b16 %v1042, %v1041
        %1091 = vmatprep.subr.bf16.mxu0 0
        %1092 = vmatpush1.bf16.msra.mxu0 %v1043
        %1093 = vmatprep.subr.bf16.mxu0 0
        %1094 = vmatpush1.bf16.msra.mxu0 %v1044
        %1095 = vmatprep.subr.bf16.mxu0 0
        %1096 = vmatpush1.bf16.msra.mxu0 %v1045
        %1097 = vmatprep.subr.bf16.mxu0 0
        %1098 = vmatpush1.bf16.msra.mxu0 %v1046
        %1099 = vmatprep.subr.bf16.mxu0 0
        %1100 = vmatpush1.bf16.msra.mxu0 %v1047
        %1101 = vmatprep.subr.bf16.mxu0 0
        %1102 = vmatpush1.bf16.msra.mxu0 %v1048
        %1103 = vmatprep.subr.bf16.mxu0 0
        %1104 = vmatpush1.bf16.msra.mxu0 %v1049
        %1105 = vmatprep.subr.bf16.mxu0 0
        %1106 = vmatpush1.bf16.msra.mxu0 %v1050
        %1107 = vmatprep.subr.bf16.mxu0 0
        %1108 = vmatpush1.bf16.msra.mxu0 %v1051
        %1109 = vmatprep.subr.bf16.mxu0 0
        %1110 = vmatpush1.bf16.msra.mxu0 %v1052
        %1111 = vmatprep.subr.bf16.mxu0 0
        %1112 = vmatpush1.bf16.msra.mxu0 %v1053
        %1113 = vmatprep.subr.bf16.mxu0 0
        %1114 = vmatpush1.bf16.msra.mxu0 %v1054
        %1115 = vmatprep.subr.bf16.mxu0 0
        %1116 = vmatpush1.bf16.msra.mxu0 %v1055
        %1117 = vmatprep.subr.bf16.mxu0 0
        %1118 = vmatpush1.bf16.msra.mxu0 %v1056
        %1119 = vmatprep.subr.bf16.mxu0 0
        %1120 = vmatpush1.bf16.msra.mxu0 %v1057
        %1121 = vmatprep.subr.bf16.mxu0 0
        %1122 = vmatpush1.bf16.msra.mxu0 %v1058
        %1123 = vmatprep.mubr.bf16.mxu0 %v846
        %1124 = vmatmul.mubr.bf16.gmra.mrb[0].mxu0 %v845
        %v1125 = vpop.f32.mrb[0].mxu0
        %v1126 = vadd.f32 %v945, %v1125
        %v1127 = vpop.f32.mrb[0].mxu0
        %v1128 = vpop.f32.mrb[0].mxu0
        %v1129 = vadd.f32 %v945, %v1128
        %v1130 = vpop.f32.mrb[0].mxu0
        %1131 = vmatprep.mubr.bf16.mxu0 %v849
        %1132 = vmatmul.mubr.bf16.gmra.mrb[0].mxu0 %v848
        %v1133 = vpop.f32.mrb[0].mxu0
        %v1134 = vadd.f32 %v945, %v1133
        %v1135 = vpop.f32.mrb[0].mxu0
        %v1136 = vpop.f32.mrb[0].mxu0
        %v1137 = vadd.f32 %v945, %v1136
        %v1138 = vpop.f32.mrb[0].mxu0
        %1139 = vmatprep.mubr.bf16.mxu0 %v852
        %1140 = vmatmul.mubr.bf16.gmra.mrb[0].mxu0 %v851
        %v1141 = vpop.f32.mrb[0].mxu0
        %v1142 = vadd.f32 %v945, %v1141
        %v1143 = vpop.f32.mrb[0].mxu0
        %v1144 = vpop.f32.mrb[0].mxu0
        %v1145 = vadd.f32 %v945, %v1144
        %v1146 = vpop.f32.mrb[0].mxu0
        %1147 = vmatprep.mubr.bf16.mxu0 %v855
        %1148 = vmatmul.mubr.bf16.gmra.mrb[0].mxu0 %v854
        %v1149 = vpop.f32.mrb[0].mxu0
        %v1150 = vadd.f32 %v945, %v1149
        %v1151 = vpop.f32.mrb[0].mxu0
        %v1152 = vpop.f32.mrb[0].mxu0
        %v1153 = vadd.f32 %v945, %v1152
        %v1154 = vpop.f32.mrb[0].mxu0
        %1155 = vmatprep.mubr.bf16.mxu0 %v858
        %1156 = vmatmul.mubr.bf16.gmra.mrb[0].mxu0 %v857
        %v1157 = vpop.f32.mrb[0].mxu0
        %v1158 = vadd.f32 %v945, %v1157
        %v1159 = vpop.f32.mrb[0].mxu0
        %v1160 = vpop.f32.mrb[0].mxu0
        %v1161 = vadd.f32 %v945, %v1160
        %v1162 = vpop.f32.mrb[0].mxu0
        %1163 = vmatprep.mubr.bf16.mxu0 %v861
        %1164 = vmatmul.mubr.bf16.gmra.mrb[0].mxu0 %v860
        %v1165 = vpop.f32.mrb[0].mxu0
        %v1166 = vadd.f32 %v945, %v1165
        %v1167 = vpop.f32.mrb[0].mxu0
        %v1168 = vpop.f32.mrb[0].mxu0
        %v1169 = vadd.f32 %v945, %v1168
        %v1170 = vpop.f32.mrb[0].mxu0
        %1171 = vmatprep.mubr.bf16.mxu0 %v864
        %1172 = vmatmul.mubr.bf16.gmra.mrb[0].mxu0 %v863
        %v1173 = vpop.f32.mrb[0].mxu0
        %v1174 = vadd.f32 %v945, %v1173
        %v1175 = vpop.f32.mrb[0].mxu0
        %v1176 = vpop.f32.mrb[0].mxu0
        %v1177 = vadd.f32 %v945, %v1176
        %v1178 = vpop.f32.mrb[0].mxu0
        %1179 = vmatprep.mubr.bf16.mxu0 %v867
        %1180 = vmatmul.mubr.bf16.gmra.mrb[0].mxu0 %v866
        %v1181 = vpop.f32.mrb[0].mxu0
        %v1182 = vadd.f32 %v945, %v1181
        %v1183 = vpop.f32.mrb[0].mxu0
        %v1184 = vpop.f32.mrb[0].mxu0
        %v1185 = vadd.f32 %v945, %v1184
        %v1186 = vpop.f32.mrb[0].mxu0
        %1187 = vmatprep.mubr.bf16.mxu0 %v870
        %1188 = vmatmul.mubr.bf16.gmra.mrb[0].mxu0 %v869
        %v1189 = vpop.f32.mrb[0].mxu0
        %v1190 = vadd.f32 %v945, %v1189
        %v1191 = vpop.f32.mrb[0].mxu0
        %v1192 = vpop.f32.mrb[0].mxu0
        %v1193 = vadd.f32 %v945, %v1192
        %v1194 = vpop.f32.mrb[0].mxu0
        %1195 = vmatprep.mubr.bf16.mxu0 %v873
        %1196 = vmatmul.mubr.bf16.gmra.mrb[0].mxu0 %v872
        %v1197 = vpop.f32.mrb[0].mxu0
        %v1198 = vadd.f32 %v945, %v1197
        %v1199 = vpop.f32.mrb[0].mxu0
        %v1200 = vpop.f32.mrb[0].mxu0
        %v1201 = vadd.f32 %v945, %v1200
        %v1202 = vpop.f32.mrb[0].mxu0
        %1203 = vmatprep.mubr.bf16.mxu0 %v876
        %1204 = vmatmul.mubr.bf16.gmra.mrb[0].mxu0 %v875
        %v1205 = vpop.f32.mrb[0].mxu0
        %v1206 = vadd.f32 %v945, %v1205
        %v1207 = vpop.f32.mrb[0].mxu0
        %v1208 = vpop.f32.mrb[0].mxu0
        %v1209 = vadd.f32 %v945, %v1208
        %v1210 = vpop.f32.mrb[0].mxu0
        %1211 = vmatprep.mubr.bf16.mxu0 %v879
        %1212 = vmatmul.mubr.bf16.gmra.mrb[0].mxu0 %v878
        %v1213 = vpop.f32.mrb[0].mxu0
        %v1214 = vadd.f32 %v945, %v1213
        %v1215 = vpop.f32.mrb[0].mxu0
        %v1216 = vpop.f32.mrb[0].mxu0
        %v1217 = vadd.f32 %v945, %v1216
        %v1218 = vpop.f32.mrb[0].mxu0
        %1219 = vmatprep.mubr.bf16.mxu0 %v882
        %1220 = vmatmul.mubr.bf16.gmra.mrb[0].mxu0 %v881
        %v1221 = vpop.f32.mrb[0].mxu0
        %v1222 = vadd.f32 %v945, %v1221
        %v1223 = vpop.f32.mrb[0].mxu0
        %v1224 = vpop.f32.mrb[0].mxu0
        %v1225 = vadd.f32 %v945, %v1224
        %v1226 = vpop.f32.mrb[0].mxu0
        %1227 = vmatprep.mubr.bf16.mxu0 %v885
        %1228 = vmatmul.mubr.bf16.gmra.mrb[0].mxu0 %v884
        %v1229 = vpop.f32.mrb[0].mxu0
        %v1230 = vadd.f32 %v945, %v1229
        %v1231 = vpop.f32.mrb[0].mxu0
        %v1232 = vpop.f32.mrb[0].mxu0
        %v1233 = vadd.f32 %v945, %v1232
        %v1234 = vpop.f32.mrb[0].mxu0
        %1235 = vmatprep.mubr.bf16.mxu0 %v888
        %1236 = vmatmul.mubr.bf16.gmra.mrb[0].mxu0 %v887
        %v1237 = vpop.f32.mrb[0].mxu0
        %v1238 = vadd.f32 %v945, %v1237
        %v1239 = vpop.f32.mrb[0].mxu0
        %v1240 = vpop.f32.mrb[0].mxu0
        %v1241 = vadd.f32 %v945, %v1240
        %v1242 = vpop.f32.mrb[0].mxu0
        %1243 = vmatprep.mubr.bf16.mxu0 %v891
        %1244 = vmatmul.mubr.bf16.gmra.mrb[0].mxu0 %v890
        %v1245 = vpop.f32.mrb[0].mxu0
        %v1246 = vadd.f32 %v945, %v1245
        %v1247 = vpop.f32.mrb[0].mxu0
        %v1248 = vpop.f32.mrb[0].mxu0
        %v1249 = vadd.f32 %v945, %v1248
        %v1250 = vpop.f32.mrb[0].mxu0
        %1251 = vdwg.mxu0
        %1252 = vmatprep.subr.bf16.mxu0 0
        %1253 = vmatpush1.bf16.msra.mxu0 %v1059
        %1254 = vmatprep.subr.bf16.mxu0 0
        %1255 = vmatpush1.bf16.msra.mxu0 %v1060
        %1256 = vmatprep.subr.bf16.mxu0 0
        %1257 = vmatpush1.bf16.msra.mxu0 %v1061
        %1258 = vmatprep.subr.bf16.mxu0 0
        %1259 = vmatpush1.bf16.msra.mxu0 %v1062
        %1260 = vmatprep.subr.bf16.mxu0 0
        %1261 = vmatpush1.bf16.msra.mxu0 %v1063
        %1262 = vmatprep.subr.bf16.mxu0 0
        %1263 = vmatpush1.bf16.msra.mxu0 %v1064
        %1264 = vmatprep.subr.bf16.mxu0 0
        %1265 = vmatpush1.bf16.msra.mxu0 %v1065
        %1266 = vmatprep.subr.bf16.mxu0 0
        %1267 = vmatpush1.bf16.msra.mxu0 %v1066
        %1268 = vmatprep.subr.bf16.mxu0 0
        %1269 = vmatpush1.bf16.msra.mxu0 0
        %1270 = vmatprep.subr.bf16.mxu0 0
        %1271 = vmatpush1.bf16.msra.mxu0 0
        %1272 = vmatprep.subr.bf16.mxu0 0
        %1273 = vmatpush1.bf16.msra.mxu0 0
        %1274 = vmatprep.subr.bf16.mxu0 0
        %1275 = vmatpush1.bf16.msra.mxu0 0
        %1276 = vmatprep.subr.bf16.mxu0 0
        %1277 = vmatpush1.bf16.msra.mxu0 0
        %1278 = vmatprep.subr.bf16.mxu0 0
        %1279 = vmatpush1.bf16.msra.mxu0 0
        %1280 = vmatprep.subr.bf16.mxu0 0
        %1281 = vmatpush1.bf16.msra.mxu0 0
        %1282 = vmatprep.subr.bf16.mxu0 0
        %1283 = vmatpush1.bf16.msra.mxu0 0
        %1284 = vmatprep.mubr.bf16.mxu0 0
        %1285 = vmatmul.mubr.bf16.gmra.mrb[0].mxu0 %v847
        %v1286 = vpop.f32.mrb[0].mxu0
        %v1287 = vadd.f32 %v1126, %v1286
        %v1288 = vpop.f32.mrb[0].mxu0
        %v1289 = vpop.f32.mrb[0].mxu0
        %v1290 = vadd.f32 %v1129, %v1289
        %v1291 = vpop.f32.mrb[0].mxu0
        %1292 = vmatprep.mubr.bf16.mxu0 0
        %1293 = vmatmul.mubr.bf16.gmra.mrb[0].mxu0 %v850
        %v1294 = vpop.f32.mrb[0].mxu0
        %v1295 = vadd.f32 %v1134, %v1294
        %v1296 = vpop.f32.mrb[0].mxu0
        %v1297 = vpop.f32.mrb[0].mxu0
        %v1298 = vadd.f32 %v1137, %v1297
        %v1299 = vpop.f32.mrb[0].mxu0
        %1300 = vmatprep.mubr.bf16.mxu0 0
        %1301 = vmatmul.mubr.bf16.gmra.mrb[0].mxu0 %v853
        %v1302 = vpop.f32.mrb[0].mxu0
        %v1303 = vadd.f32 %v1142, %v1302
        %v1304 = vpop.f32.mrb[0].mxu0
        %v1305 = vpop.f32.mrb[0].mxu0
        %v1306 = vadd.f32 %v1145, %v1305
        %v1307 = vpop.f32.mrb[0].mxu0
        %1308 = vmatprep.mubr.bf16.mxu0 0
        %1309 = vmatmul.mubr.bf16.gmra.mrb[0].mxu0 %v856
        %v1310 = vpop.f32.mrb[0].mxu0
        %v1311 = vadd.f32 %v1150, %v1310
        %v1312 = vpop.f32.mrb[0].mxu0
        %v1313 = vpop.f32.mrb[0].mxu0
        %v1314 = vadd.f32 %v1153, %v1313
        %v1315 = vpop.f32.mrb[0].mxu0
        %1316 = vmatprep.mubr.bf16.mxu0 0
        %1317 = vmatmul.mubr.bf16.gmra.mrb[0].mxu0 %v859
        %v1318 = vpop.f32.mrb[0].mxu0
        %v1319 = vadd.f32 %v1158, %v1318
        %v1320 = vpop.f32.mrb[0].mxu0
        %v1321 = vpop.f32.mrb[0].mxu0
        %v1322 = vadd.f32 %v1161, %v1321
        %v1323 = vpop.f32.mrb[0].mxu0
        %1324 = vmatprep.mubr.bf16.mxu0 0
        %1325 = vmatmul.mubr.bf16.gmra.mrb[0].mxu0 %v862
        %v1326 = vpop.f32.mrb[0].mxu0
        %v1327 = vadd.f32 %v1166, %v1326
        %v1328 = vpop.f32.mrb[0].mxu0
        %v1329 = vpop.f32.mrb[0].mxu0
        %v1330 = vadd.f32 %v1169, %v1329
        %v1331 = vpop.f32.mrb[0].mxu0
        %1332 = vmatprep.mubr.bf16.mxu0 0
        %1333 = vmatmul.mubr.bf16.gmra.mrb[0].mxu0 %v865
        %v1334 = vpop.f32.mrb[0].mxu0
        %v1335 = vadd.f32 %v1174, %v1334
        %v1336 = vpop.f32.mrb[0].mxu0
        %v1337 = vpop.f32.mrb[0].mxu0
        %v1338 = vadd.f32 %v1177, %v1337
        %v1339 = vpop.f32.mrb[0].mxu0
        %1340 = vmatprep.mubr.bf16.mxu0 0
        %1341 = vmatmul.mubr.bf16.gmra.mrb[0].mxu0 %v868
        %v1342 = vpop.f32.mrb[0].mxu0
        %v1343 = vadd.f32 %v1182, %v1342
        %v1344 = vpop.f32.mrb[0].mxu0
        %v1345 = vpop.f32.mrb[0].mxu0
        %v1346 = vadd.f32 %v1185, %v1345
        %v1347 = vpop.f32.mrb[0].mxu0
        %1348 = vmatprep.mubr.bf16.mxu0 0
        %1349 = vmatmul.mubr.bf16.gmra.mrb[0].mxu0 %v871
        %v1350 = vpop.f32.mrb[0].mxu0
        %v1351 = vadd.f32 %v1190, %v1350
        %v1352 = vpop.f32.mrb[0].mxu0
        %v1353 = vpop.f32.mrb[0].mxu0
        %v1354 = vadd.f32 %v1193, %v1353
        %v1355 = vpop.f32.mrb[0].mxu0
        %1356 = vmatprep.mubr.bf16.mxu0 0
        %1357 = vmatmul.mubr.bf16.gmra.mrb[0].mxu0 %v874
        %v1358 = vpop.f32.mrb[0].mxu0
        %v1359 = vadd.f32 %v1198, %v1358
        %v1360 = vpop.f32.mrb[0].mxu0
        %v1361 = vpop.f32.mrb[0].mxu0
        %v1362 = vadd.f32 %v1201, %v1361
        %v1363 = vpop.f32.mrb[0].mxu0
        %1364 = vmatprep.mubr.bf16.mxu0 0
        %1365 = vmatmul.mubr.bf16.gmra.mrb[0].mxu0 %v877
        %v1366 = vpop.f32.mrb[0].mxu0
        %v1367 = vadd.f32 %v1206, %v1366
        %v1368 = vpop.f32.mrb[0].mxu0
        %v1369 = vpop.f32.mrb[0].mxu0
        %v1370 = vadd.f32 %v1209, %v1369
        %v1371 = vpop.f32.mrb[0].mxu0
        %1372 = vmatprep.mubr.bf16.mxu0 0
        %1373 = vmatmul.mubr.bf16.gmra.mrb[0].mxu0 %v880
        %v1374 = vpop.f32.mrb[0].mxu0
        %v1375 = vadd.f32 %v1214, %v1374
        %v1376 = vpop.f32.mrb[0].mxu0
        %v1377 = vpop.f32.mrb[0].mxu0
        %v1378 = vadd.f32 %v1217, %v1377
        %v1379 = vpop.f32.mrb[0].mxu0
        %1380 = vmatprep.mubr.bf16.mxu0 0
        %1381 = vmatmul.mubr.bf16.gmra.mrb[0].mxu0 %v883
        %v1382 = vpop.f32.mrb[0].mxu0
        %v1383 = vadd.f32 %v1222, %v1382
        %v1384 = vpop.f32.mrb[0].mxu0
        %v1385 = vpop.f32.mrb[0].mxu0
        %v1386 = vadd.f32 %v1225, %v1385
        %v1387 = vpop.f32.mrb[0].mxu0
        %1388 = vmatprep.mubr.bf16.mxu0 0
        %1389 = vmatmul.mubr.bf16.gmra.mrb[0].mxu0 %v886
        %v1390 = vpop.f32.mrb[0].mxu0
        %v1391 = vadd.f32 %v1230, %v1390
        %v1392 = vpop.f32.mrb[0].mxu0
        %v1393 = vpop.f32.mrb[0].mxu0
        %v1394 = vadd.f32 %v1233, %v1393
        %v1395 = vpop.f32.mrb[0].mxu0
        %1396 = vmatprep.mubr.bf16.mxu0 0
        %1397 = vmatmul.mubr.bf16.gmra.mrb[0].mxu0 %v889
        %v1398 = vpop.f32.mrb[0].mxu0
        %v1399 = vadd.f32 %v1238, %v1398
        %v1400 = vpop.f32.mrb[0].mxu0
        %v1401 = vpop.f32.mrb[0].mxu0
        %v1402 = vadd.f32 %v1241, %v1401
        %v1403 = vpop.f32.mrb[0].mxu0
        %1404 = vmatprep.mubr.bf16.mxu0 0
        %1405 = vmatmul.mubr.bf16.gmra.mrb[0].mxu0 %v892
        %v1406 = vpop.f32.mrb[0].mxu0
        %v1407 = vadd.f32 %v1246, %v1406
        %v1408 = vpop.f32.mrb[0].mxu0
        %v1409 = vpop.f32.mrb[0].mxu0
        %v1410 = vadd.f32 %v1249, %v1409
        %v1411 = vpop.f32.mrb[0].mxu0
        %1412 = vdwg.mxu0
        %1413 = vst [vmem:[%s163] sm:$0xff] %v1287
        %1414 = vst [vmem:[%s163 + $0x8] sm:$0xff] %v1290
        %1415 = vst [vmem:[%s163 + $0x10] sm:$0xff] %v1295
        %1416 = vst [vmem:[%s163 + $0x18] sm:$0xff] %v1298
        %1417 = vst [vmem:[%s163 + $0x20] sm:$0xff] %v1303
        %1418 = vst [vmem:[%s163 + $0x28] sm:$0xff] %v1306
        %1419 = vst [vmem:[%s163 + $0x30] sm:$0xff] %v1311
        %1420 = vst [vmem:[%s163 + $0x38] sm:$0xff] %v1314
        %1421 = vst [vmem:[%s163 + $0x40] sm:$0xff] %v1319
        %1422 = vst [vmem:[%s163 + $0x48] sm:$0xff] %v1322
        %1423 = vst [vmem:[%s163 + $0x50] sm:$0xff] %v1327
        %1424 = vst [vmem:[%s163 + $0x58] sm:$0xff] %v1330
        %1425 = vst [vmem:[%s163 + $0x60] sm:$0xff] %v1335
        %1426 = vst [vmem:[%s163 + $0x68] sm:$0xff] %v1338
        %1427 = vst [vmem:[%s163 + $0x70] sm:$0xff] %v1343
        %1428 = vst [vmem:[%s163 + $0x78] sm:$0xff] %v1346
        %1429 = vst [vmem:[%s163 + $0x80] sm:$0xff] %v1351
        %1430 = vst [vmem:[%s163 + $0x88] sm:$0xff] %v1354
        %1431 = vst [vmem:[%s163 + $0x90] sm:$0xff] %v1359
        %1432 = vst [vmem:[%s163 + $0x98] sm:$0xff] %v1362
        %1433 = vst [vmem:[%s163 + $0xa0] sm:$0xff] %v1367
        %1434 = vst [vmem:[%s163 + $0xa8] sm:$0xff] %v1370
        %1435 = vst [vmem:[%s163 + $0xb0] sm:$0xff] %v1375
        %1436 = vst [vmem:[%s163 + $0xb8] sm:$0xff] %v1378
        %1437 = vst [vmem:[%s163 + $0xc0] sm:$0xff] %v1383
        %1438 = vst [vmem:[%s163 + $0xc8] sm:$0xff] %v1386
        %1439 = vst [vmem:[%s163 + $0xd0] sm:$0xff] %v1391
        %1440 = vst [vmem:[%s163 + $0xd8] sm:$0xff] %v1394
        %1441 = vst [vmem:[%s163 + $0xe0] sm:$0xff] %v1399
        %1442 = vst [vmem:[%s163 + $0xe8] sm:$0xff] %v1402
        %1443 = vst [vmem:[%s163 + $0xf0] sm:$0xff] %v1407
        %1444 = vst [vmem:[%s163 + $0xf8] sm:$0xff] %v1410
        %v1445 = vld [vmem:[%s267] sm:$0xff]
        %v1446 = vld [vmem:[%s267 + $0x8] sm:$0xff]
        %v1447 = vld [vmem:[%s267 + $0x18] sm:$0xff]
        %v1448 = vld [vmem:[%s267 + $0x20] sm:$0xff]
        %v1449 = vld [vmem:[%s267 + $0x30] sm:$0xff]
        %v1450 = vld [vmem:[%s267 + $0x38] sm:$0xff]
        %v1451 = vld [vmem:[%s267 + $0x48] sm:$0xff]
        %v1452 = vld [vmem:[%s267 + $0x50] sm:$0xff]
        %v1453 = vld [vmem:[%s267 + $0x60] sm:$0xff]
        %v1454 = vld [vmem:[%s267 + $0x68] sm:$0xff]
        %v1455 = vld [vmem:[%s267 + $0x78] sm:$0xff]
        %v1456 = vld [vmem:[%s267 + $0x80] sm:$0xff]
        %v1457 = vld [vmem:[%s267 + $0x90] sm:$0xff]
        %v1458 = vld [vmem:[%s267 + $0x98] sm:$0xff]
        %v1459 = vld [vmem:[%s267 + $0xa8] sm:$0xff]
        %v1460 = vld [vmem:[%s267 + $0xb0] sm:$0xff]
        %v1461 = vld [vmem:[%s267 + $0xc0] sm:$0xff]
        %v1462 = vld [vmem:[%s267 + $0xc8] sm:$0xff]
        %v1463 = vld [vmem:[%s267 + $0xd8] sm:$0xff]
        %v1464 = vld [vmem:[%s267 + $0xe0] sm:$0xff]
        %v1465 = vld [vmem:[%s267 + $0xf0] sm:$0xff]
        %v1466 = vld [vmem:[%s267 + $0xf8] sm:$0xff]
        %v1467 = vld [vmem:[%s267 + $0x108] sm:$0xff]
        %v1468 = vld [vmem:[%s267 + $0x110] sm:$0xff]
        %v1469 = vld [vmem:[%s267 + $0x120] sm:$0xff]
        %v1470 = vld [vmem:[%s267 + $0x128] sm:$0xff]
        %v1471 = vld [vmem:[%s267 + $0x138] sm:$0xff]
        %v1472 = vld [vmem:[%s267 + $0x140] sm:$0xff]
        %v1473 = vld [vmem:[%s267 + $0x150] sm:$0xff]
        %v1474 = vld [vmem:[%s267 + $0x158] sm:$0xff]
        %v1475 = vld [vmem:[%s267 + $0x168] sm:$0xff]
        %v1476 = vld [vmem:[%s267 + $0x170] sm:$0xff]
        %v1477 = vld [vmem:[%s267 + $0x1] sm:$0xff]
        %v1478 = vld [vmem:[%s267 + $0x9] sm:$0xff]
        %v1479 = vld [vmem:[%s267 + $0x19] sm:$0xff]
        %v1480 = vld [vmem:[%s267 + $0x21] sm:$0xff]
        %v1481 = vld [vmem:[%s267 + $0x31] sm:$0xff]
        %v1482 = vld [vmem:[%s267 + $0x39] sm:$0xff]
        %v1483 = vld [vmem:[%s267 + $0x49] sm:$0xff]
        %v1484 = vld [vmem:[%s267 + $0x51] sm:$0xff]
        %v1485 = vld [vmem:[%s267 + $0x61] sm:$0xff]
        %v1486 = vld [vmem:[%s267 + $0x69] sm:$0xff]
        %v1487 = vld [vmem:[%s267 + $0x79] sm:$0xff]
        %v1488 = vld [vmem:[%s267 + $0x81] sm:$0xff]
        %v1489 = vld [vmem:[%s267 + $0x91] sm:$0xff]
        %v1490 = vld [vmem:[%s267 + $0x99] sm:$0xff]
        %v1491 = vld [vmem:[%s267 + $0xa9] sm:$0xff]
        %v1492 = vld [vmem:[%s267 + $0xb1] sm:$0xff]
        %v1493 = vld [vmem:[%s267 + $0xc1] sm:$0xff]
        %v1494 = vld [vmem:[%s267 + $0xc9] sm:$0xff]
        %v1495 = vld [vmem:[%s267 + $0xd9] sm:$0xff]
        %v1496 = vld [vmem:[%s267 + $0xe1] sm:$0xff]
        %v1497 = vld [vmem:[%s267 + $0xf1] sm:$0xff]
        %v1498 = vld [vmem:[%s267 + $0xf9] sm:$0xff]
        %v1499 = vld [vmem:[%s267 + $0x109] sm:$0xff]
        %v1500 = vld [vmem:[%s267 + $0x111] sm:$0xff]
        %v1501 = vld [vmem:[%s267 + $0x121] sm:$0xff]
        %v1502 = vld [vmem:[%s267 + $0x129] sm:$0xff]
        %v1503 = vld [vmem:[%s267 + $0x139] sm:$0xff]
        %v1504 = vld [vmem:[%s267 + $0x141] sm:$0xff]
        %v1505 = vld [vmem:[%s267 + $0x151] sm:$0xff]
        %v1506 = vld [vmem:[%s267 + $0x159] sm:$0xff]
        %v1507 = vld [vmem:[%s267 + $0x169] sm:$0xff]
        %v1508 = vld [vmem:[%s267 + $0x171] sm:$0xff]
        %v1509 = vld [vmem:[%s267 + $0x2] sm:$0xff]
        %v1510 = vld [vmem:[%s267 + $0xa] sm:$0xff]
        %v1511 = vld [vmem:[%s267 + $0x1a] sm:$0xff]
        %v1512 = vld [vmem:[%s267 + $0x22] sm:$0xff]
        %v1513 = vld [vmem:[%s267 + $0x32] sm:$0xff]
        %v1514 = vld [vmem:[%s267 + $0x3a] sm:$0xff]
        %v1515 = vld [vmem:[%s267 + $0x4a] sm:$0xff]
        %v1516 = vld [vmem:[%s267 + $0x52] sm:$0xff]
        %v1517 = vld [vmem:[%s267 + $0x62] sm:$0xff]
        %v1518 = vld [vmem:[%s267 + $0x6a] sm:$0xff]
        %v1519 = vld [vmem:[%s267 + $0x7a] sm:$0xff]
        %v1520 = vld [vmem:[%s267 + $0x82] sm:$0xff]
        %v1521 = vld [vmem:[%s267 + $0x92] sm:$0xff]
        %v1522 = vld [vmem:[%s267 + $0x9a] sm:$0xff]
        %v1523 = vld [vmem:[%s267 + $0xaa] sm:$0xff]
        %v1524 = vld [vmem:[%s267 + $0xb2] sm:$0xff]
        %v1525 = vld [vmem:[%s267 + $0xc2] sm:$0xff]
        %v1526 = vld [vmem:[%s267 + $0xca] sm:$0xff]
        %v1527 = vld [vmem:[%s267 + $0xda] sm:$0xff]
        %v1528 = vld [vmem:[%s267 + $0xe2] sm:$0xff]
        %v1529 = vld [vmem:[%s267 + $0xf2] sm:$0xff]
        %v1530 = vld [vmem:[%s267 + $0xfa] sm:$0xff]
        %v1531 = vld [vmem:[%s267 + $0x10a] sm:$0xff]
        %v1532 = vld [vmem:[%s267 + $0x112] sm:$0xff]
        %v1533 = vld [vmem:[%s267 + $0x122] sm:$0xff]
        %v1534 = vld [vmem:[%s267 + $0x12a] sm:$0xff]
        %v1535 = vld [vmem:[%s267 + $0x13a] sm:$0xff]
        %v1536 = vld [vmem:[%s267 + $0x142] sm:$0xff]
        %v1537 = vld [vmem:[%s267 + $0x152] sm:$0xff]
        %v1538 = vld [vmem:[%s267 + $0x15a] sm:$0xff]
        %v1539 = vld [vmem:[%s267 + $0x16a] sm:$0xff]
        %v1540 = vld [vmem:[%s267 + $0x172] sm:$0xff]
        %s1541 = scalar_lea.vmem %s168, 48
        %v1542 = vld [vmem:[%s1541] sm:$0xff]
        %v1543 = vld [vmem:[%s1541 + $0x8] sm:$0xff]
        %v1544 = vld [vmem:[%s1541 + $0x18] sm:$0xff]
        %v1545 = vld [vmem:[%s1541 + $0x20] sm:$0xff]
        %v1546 = vld [vmem:[%s1541 + $0x30] sm:$0xff]
        %v1547 = vld [vmem:[%s1541 + $0x38] sm:$0xff]
        %v1548 = vld [vmem:[%s1541 + $0x48] sm:$0xff]
        %v1549 = vld [vmem:[%s1541 + $0x50] sm:$0xff]
        %v1550 = vld [vmem:[%s1541 + $0x60] sm:$0xff]
        %v1551 = vld [vmem:[%s1541 + $0x68] sm:$0xff]
        %v1552 = vld [vmem:[%s1541 + $0x78] sm:$0xff]
        %v1553 = vld [vmem:[%s1541 + $0x80] sm:$0xff]
        %v1554 = vld [vmem:[%s1541 + $0x90] sm:$0xff]
        %v1555 = vld [vmem:[%s1541 + $0x98] sm:$0xff]
        %v1556 = vld [vmem:[%s1541 + $0xa8] sm:$0xff]
        %v1557 = vld [vmem:[%s1541 + $0xb0] sm:$0xff]
        %v1558 = vld [vmem:[%s1541 + $0xc0] sm:$0xff]
        %v1559 = vld [vmem:[%s1541 + $0xc8] sm:$0xff]
        %v1560 = vld [vmem:[%s1541 + $0xd8] sm:$0xff]
        %v1561 = vld [vmem:[%s1541 + $0xe0] sm:$0xff]
        %v1562 = vld [vmem:[%s1541 + $0xf0] sm:$0xff]
        %v1563 = vld [vmem:[%s1541 + $0xf8] sm:$0xff]
        %v1564 = vld [vmem:[%s1541 + $0x108] sm:$0xff]
        %v1565 = vld [vmem:[%s1541 + $0x110] sm:$0xff]
        %v1566 = vld [vmem:[%s1541 + $0x120] sm:$0xff]
        %v1567 = vld [vmem:[%s1541 + $0x128] sm:$0xff]
        %v1568 = vld [vmem:[%s1541 + $0x138] sm:$0xff]
        %v1569 = vld [vmem:[%s1541 + $0x140] sm:$0xff]
        %v1570 = vld [vmem:[%s1541 + $0x150] sm:$0xff]
        %v1571 = vld [vmem:[%s1541 + $0x158] sm:$0xff]
        %v1572 = vld [vmem:[%s1541 + $0x168] sm:$0xff]
        %v1573 = vld [vmem:[%s1541 + $0x170] sm:$0xff]
        %v1574 = vld [vmem:[%s1541 + $0x1] sm:$0xff]
        %v1575 = vld [vmem:[%s1541 + $0x9] sm:$0xff]
        %v1576 = vld [vmem:[%s1541 + $0x19] sm:$0xff]
        %v1577 = vld [vmem:[%s1541 + $0x21] sm:$0xff]
        %v1578 = vld [vmem:[%s1541 + $0x31] sm:$0xff]
        %v1579 = vld [vmem:[%s1541 + $0x39] sm:$0xff]
        %v1580 = vld [vmem:[%s1541 + $0x49] sm:$0xff]
        %v1581 = vld [vmem:[%s1541 + $0x51] sm:$0xff]
        %v1582 = vld [vmem:[%s1541 + $0x61] sm:$0xff]
        %v1583 = vld [vmem:[%s1541 + $0x69] sm:$0xff]
        %v1584 = vld [vmem:[%s1541 + $0x79] sm:$0xff]
        %v1585 = vld [vmem:[%s1541 + $0x81] sm:$0xff]
        %v1586 = vld [vmem:[%s1541 + $0x91] sm:$0xff]
        %v1587 = vld [vmem:[%s1541 + $0x99] sm:$0xff]
        %v1588 = vld [vmem:[%s1541 + $0xa9] sm:$0xff]
        %v1589 = vld [vmem:[%s1541 + $0xb1] sm:$0xff]
        %v1590 = vld [vmem:[%s1541 + $0xc1] sm:$0xff]
        %v1591 = vld [vmem:[%s1541 + $0xc9] sm:$0xff]
        %v1592 = vld [vmem:[%s1541 + $0xd9] sm:$0xff]
        %v1593 = vld [vmem:[%s1541 + $0xe1] sm:$0xff]
        %v1594 = vld [vmem:[%s1541 + $0xf1] sm:$0xff]
        %v1595 = vld [vmem:[%s1541 + $0xf9] sm:$0xff]
        %v1596 = vld [vmem:[%s1541 + $0x109] sm:$0xff]
        %v1597 = vld [vmem:[%s1541 + $0x111] sm:$0xff]
        %v1598 = vld [vmem:[%s1541 + $0x121] sm:$0xff]
        %v1599 = vld [vmem:[%s1541 + $0x129] sm:$0xff]
        %v1600 = vld [vmem:[%s1541 + $0x139] sm:$0xff]
        %v1601 = vld [vmem:[%s1541 + $0x141] sm:$0xff]
        %v1602 = vld [vmem:[%s1541 + $0x151] sm:$0xff]
        %v1603 = vld [vmem:[%s1541 + $0x159] sm:$0xff]
        %v1604 = vld [vmem:[%s1541 + $0x169] sm:$0xff]
        %v1605 = vld [vmem:[%s1541 + $0x171] sm:$0xff]
        %v1606 = vld [vmem:[%s1541 + $0x2] sm:$0xff]
        %v1607 = vld [vmem:[%s1541 + $0xa] sm:$0xff]
        %v1608 = vld [vmem:[%s1541 + $0x1a] sm:$0xff]
        %v1609 = vld [vmem:[%s1541 + $0x22] sm:$0xff]
        %v1610 = vld [vmem:[%s1541 + $0x32] sm:$0xff]
        %v1611 = vld [vmem:[%s1541 + $0x3a] sm:$0xff]
        %v1612 = vld [vmem:[%s1541 + $0x4a] sm:$0xff]
        %v1613 = vld [vmem:[%s1541 + $0x52] sm:$0xff]
        %v1614 = vld [vmem:[%s1541 + $0x62] sm:$0xff]
        %v1615 = vld [vmem:[%s1541 + $0x6a] sm:$0xff]
        %v1616 = vld [vmem:[%s1541 + $0x7a] sm:$0xff]
        %v1617 = vld [vmem:[%s1541 + $0x82] sm:$0xff]
        %v1618 = vld [vmem:[%s1541 + $0x92] sm:$0xff]
        %v1619 = vld [vmem:[%s1541 + $0x9a] sm:$0xff]
        %v1620 = vld [vmem:[%s1541 + $0xaa] sm:$0xff]
        %v1621 = vld [vmem:[%s1541 + $0xb2] sm:$0xff]
        %v1622 = vld [vmem:[%s1541 + $0xc2] sm:$0xff]
        %v1623 = vld [vmem:[%s1541 + $0xca] sm:$0xff]
        %v1624 = vld [vmem:[%s1541 + $0xda] sm:$0xff]
        %v1625 = vld [vmem:[%s1541 + $0xe2] sm:$0xff]
        %v1626 = vld [vmem:[%s1541 + $0xf2] sm:$0xff]
        %v1627 = vld [vmem:[%s1541 + $0xfa] sm:$0xff]
        %v1628 = vld [vmem:[%s1541 + $0x10a] sm:$0xff]
        %v1629 = vld [vmem:[%s1541 + $0x112] sm:$0xff]
        %v1630 = vld [vmem:[%s1541 + $0x122] sm:$0xff]
        %v1631 = vld [vmem:[%s1541 + $0x12a] sm:$0xff]
        %v1632 = vld [vmem:[%s1541 + $0x13a] sm:$0xff]
        %v1633 = vld [vmem:[%s1541 + $0x142] sm:$0xff]
        %v1634 = vld [vmem:[%s1541 + $0x152] sm:$0xff]
        %v1635 = vld [vmem:[%s1541 + $0x15a] sm:$0xff]
        %v1636 = vld [vmem:[%s1541 + $0x16a] sm:$0xff]
        %v1637 = vld [vmem:[%s1541 + $0x172] sm:$0xff]
        %1670 = vrot.lane.b32.xlu0 %v1477, 64
        %v1671 = vpop.permute.xlu0 %1670
        %1672 = vrot.lane.b32.xlu0 %v1478, 64
        %v1673 = vpop.permute.xlu0 %1672
        %1674 = vrot.lane.b32.xlu0 %v1479, 64
        %v1675 = vpop.permute.xlu0 %1674
        %1676 = vrot.lane.b32.xlu0 %v1480, 64
        %v1677 = vpop.permute.xlu0 %1676
        %1678 = vrot.lane.b32.xlu0 %v1481, 64
        %v1679 = vpop.permute.xlu0 %1678
        %1680 = vrot.lane.b32.xlu0 %v1482, 64
        %v1681 = vpop.permute.xlu0 %1680
        %1682 = vrot.lane.b32.xlu0 %v1483, 64
        %v1683 = vpop.permute.xlu0 %1682
        %1684 = vrot.lane.b32.xlu0 %v1484, 64
        %v1685 = vpop.permute.xlu0 %1684
        %1686 = vrot.lane.b32.xlu0 %v1485, 64
        %v1687 = vpop.permute.xlu0 %1686
        %1688 = vrot.lane.b32.xlu0 %v1486, 64
        %v1689 = vpop.permute.xlu0 %1688
        %1690 = vrot.lane.b32.xlu0 %v1487, 64
        %v1691 = vpop.permute.xlu0 %1690
        %1692 = vrot.lane.b32.xlu0 %v1488, 64
        %v1693 = vpop.permute.xlu0 %1692
        %1694 = vrot.lane.b32.xlu0 %v1489, 64
        %v1695 = vpop.permute.xlu0 %1694
        %1696 = vrot.lane.b32.xlu0 %v1490, 64
        %v1697 = vpop.permute.xlu0 %1696
        %1698 = vrot.lane.b32.xlu0 %v1491, 64
        %v1699 = vpop.permute.xlu0 %1698
        %1700 = vrot.lane.b32.xlu0 %v1492, 64
        %v1701 = vpop.permute.xlu0 %1700
        %1702 = vrot.lane.b32.xlu0 %v1493, 64
        %v1703 = vpop.permute.xlu0 %1702
        %1704 = vrot.lane.b32.xlu0 %v1494, 64
        %v1705 = vpop.permute.xlu0 %1704
        %1706 = vrot.lane.b32.xlu0 %v1495, 64
        %v1707 = vpop.permute.xlu0 %1706
        %1708 = vrot.lane.b32.xlu0 %v1496, 64
        %v1709 = vpop.permute.xlu0 %1708
        %1710 = vrot.lane.b32.xlu0 %v1497, 64
        %v1711 = vpop.permute.xlu0 %1710
        %1712 = vrot.lane.b32.xlu0 %v1498, 64
        %v1713 = vpop.permute.xlu0 %1712
        %1714 = vrot.lane.b32.xlu0 %v1499, 64
        %v1715 = vpop.permute.xlu0 %1714
        %1716 = vrot.lane.b32.xlu0 %v1500, 64
        %v1717 = vpop.permute.xlu0 %1716
        %1718 = vrot.lane.b32.xlu0 %v1501, 64
        %v1719 = vpop.permute.xlu0 %1718
        %1720 = vrot.lane.b32.xlu0 %v1502, 64
        %v1721 = vpop.permute.xlu0 %1720
        %1722 = vrot.lane.b32.xlu0 %v1503, 64
        %v1723 = vpop.permute.xlu0 %1722
        %1724 = vrot.lane.b32.xlu0 %v1504, 64
        %v1725 = vpop.permute.xlu0 %1724
        %1726 = vrot.lane.b32.xlu0 %v1505, 64
        %v1727 = vpop.permute.xlu0 %1726
        %1728 = vrot.lane.b32.xlu0 %v1506, 64
        %v1729 = vpop.permute.xlu0 %1728
        %1730 = vrot.lane.b32.xlu0 %v1507, 64
        %v1731 = vpop.permute.xlu0 %1730
        %1732 = vrot.lane.b32.xlu0 %v1508, 64
        %v1733 = vpop.permute.xlu0 %1732
        %1798 = vrot.lane.b32.xlu0 %v1542, 64
        %v1799 = vpop.permute.xlu0 %1798
        %1800 = vrot.lane.b32.xlu0 %v1543, 64
        %v1801 = vpop.permute.xlu0 %1800
        %1802 = vrot.lane.b32.xlu0 %v1544, 64
        %v1803 = vpop.permute.xlu0 %1802
        %1804 = vrot.lane.b32.xlu0 %v1545, 64
        %v1805 = vpop.permute.xlu0 %1804
        %1806 = vrot.lane.b32.xlu0 %v1546, 64
        %v1807 = vpop.permute.xlu0 %1806
        %1808 = vrot.lane.b32.xlu0 %v1547, 64
        %v1809 = vpop.permute.xlu0 %1808
        %1810 = vrot.lane.b32.xlu0 %v1548, 64
        %v1811 = vpop.permute.xlu0 %1810
        %1812 = vrot.lane.b32.xlu0 %v1549, 64
        %v1813 = vpop.permute.xlu0 %1812
        %1814 = vrot.lane.b32.xlu0 %v1550, 64
        %v1815 = vpop.permute.xlu0 %1814
        %1816 = vrot.lane.b32.xlu0 %v1551, 64
        %v1817 = vpop.permute.xlu0 %1816
        %1818 = vrot.lane.b32.xlu0 %v1552, 64
        %v1819 = vpop.permute.xlu0 %1818
        %1820 = vrot.lane.b32.xlu0 %v1553, 64
        %v1821 = vpop.permute.xlu0 %1820
        %1822 = vrot.lane.b32.xlu0 %v1554, 64
        %v1823 = vpop.permute.xlu0 %1822
        %1824 = vrot.lane.b32.xlu0 %v1555, 64
        %v1825 = vpop.permute.xlu0 %1824
        %1826 = vrot.lane.b32.xlu0 %v1556, 64
        %v1827 = vpop.permute.xlu0 %1826
        %1828 = vrot.lane.b32.xlu0 %v1557, 64
        %v1829 = vpop.permute.xlu0 %1828
        %1830 = vrot.lane.b32.xlu0 %v1558, 64
        %v1831 = vpop.permute.xlu0 %1830
        %1832 = vrot.lane.b32.xlu0 %v1559, 64
        %v1833 = vpop.permute.xlu0 %1832
        %1834 = vrot.lane.b32.xlu0 %v1560, 64
        %v1835 = vpop.permute.xlu0 %1834
        %1836 = vrot.lane.b32.xlu0 %v1561, 64
        %v1837 = vpop.permute.xlu0 %1836
        %1838 = vrot.lane.b32.xlu0 %v1562, 64
        %v1839 = vpop.permute.xlu0 %1838
        %1840 = vrot.lane.b32.xlu0 %v1563, 64
        %v1841 = vpop.permute.xlu0 %1840
        %1842 = vrot.lane.b32.xlu0 %v1564, 64
        %v1843 = vpop.permute.xlu0 %1842
        %1844 = vrot.lane.b32.xlu0 %v1565, 64
        %v1845 = vpop.permute.xlu0 %1844
        %1846 = vrot.lane.b32.xlu0 %v1566, 64
        %v1847 = vpop.permute.xlu0 %1846
        %1848 = vrot.lane.b32.xlu0 %v1567, 64
        %v1849 = vpop.permute.xlu0 %1848
        %1850 = vrot.lane.b32.xlu0 %v1568, 64
        %v1851 = vpop.permute.xlu0 %1850
        %1852 = vrot.lane.b32.xlu0 %v1569, 64
        %v1853 = vpop.permute.xlu0 %1852
        %1854 = vrot.lane.b32.xlu0 %v1570, 64
        %v1855 = vpop.permute.xlu0 %1854
        %1856 = vrot.lane.b32.xlu0 %v1571, 64
        %v1857 = vpop.permute.xlu0 %1856
        %1858 = vrot.lane.b32.xlu0 %v1572, 64
        %v1859 = vpop.permute.xlu0 %1858
        %1860 = vrot.lane.b32.xlu0 %v1573, 64
        %v1861 = vpop.permute.xlu0 %1860
        %1926 = vrot.lane.b32.xlu0 %v1606, 64
        %v1927 = vpop.permute.xlu0 %1926
        %1928 = vrot.lane.b32.xlu0 %v1607, 64
        %v1929 = vpop.permute.xlu0 %1928
        %1930 = vrot.lane.b32.xlu0 %v1608, 64
        %v1931 = vpop.permute.xlu0 %1930
        %1932 = vrot.lane.b32.xlu0 %v1609, 64
        %v1933 = vpop.permute.xlu0 %1932
        %1934 = vrot.lane.b32.xlu0 %v1610, 64
        %v1935 = vpop.permute.xlu0 %1934
        %1936 = vrot.lane.b32.xlu0 %v1611, 64
        %v1937 = vpop.permute.xlu0 %1936
        %1938 = vrot.lane.b32.xlu0 %v1612, 64
        %v1939 = vpop.permute.xlu0 %1938
        %1940 = vrot.lane.b32.xlu0 %v1613, 64
        %v1941 = vpop.permute.xlu0 %1940
        %1942 = vrot.lane.b32.xlu0 %v1614, 64
        %v1943 = vpop.permute.xlu0 %1942
        %1944 = vrot.lane.b32.xlu0 %v1615, 64
        %v1945 = vpop.permute.xlu0 %1944
        %1946 = vrot.lane.b32.xlu0 %v1616, 64
        %v1947 = vpop.permute.xlu0 %1946
        %1948 = vrot.lane.b32.xlu0 %v1617, 64
        %v1949 = vpop.permute.xlu0 %1948
        %1950 = vrot.lane.b32.xlu0 %v1618, 64
        %v1951 = vpop.permute.xlu0 %1950
        %1952 = vrot.lane.b32.xlu0 %v1619, 64
        %v1953 = vpop.permute.xlu0 %1952
        %1954 = vrot.lane.b32.xlu0 %v1620, 64
        %v1955 = vpop.permute.xlu0 %1954
        %1956 = vrot.lane.b32.xlu0 %v1621, 64
        %v1957 = vpop.permute.xlu0 %1956
        %1958 = vrot.lane.b32.xlu0 %v1622, 64
        %v1959 = vpop.permute.xlu0 %1958
        %1960 = vrot.lane.b32.xlu0 %v1623, 64
        %v1961 = vpop.permute.xlu0 %1960
        %1962 = vrot.lane.b32.xlu0 %v1624, 64
        %v1963 = vpop.permute.xlu0 %1962
        %1964 = vrot.lane.b32.xlu0 %v1625, 64
        %v1965 = vpop.permute.xlu0 %1964
        %1966 = vrot.lane.b32.xlu0 %v1626, 64
        %v1967 = vpop.permute.xlu0 %1966
        %1968 = vrot.lane.b32.xlu0 %v1627, 64
        %v1969 = vpop.permute.xlu0 %1968
        %1970 = vrot.lane.b32.xlu0 %v1628, 64
        %v1971 = vpop.permute.xlu0 %1970
        %1972 = vrot.lane.b32.xlu0 %v1629, 64
        %v1973 = vpop.permute.xlu0 %1972
        %1974 = vrot.lane.b32.xlu0 %v1630, 64
        %v1975 = vpop.permute.xlu0 %1974
        %1976 = vrot.lane.b32.xlu0 %v1631, 64
        %v1977 = vpop.permute.xlu0 %1976
        %1978 = vrot.lane.b32.xlu0 %v1632, 64
        %v1979 = vpop.permute.xlu0 %1978
        %1980 = vrot.lane.b32.xlu0 %v1633, 64
        %v1981 = vpop.permute.xlu0 %1980
        %1982 = vrot.lane.b32.xlu0 %v1634, 64
        %v1983 = vpop.permute.xlu0 %1982
        %1984 = vrot.lane.b32.xlu0 %v1635, 64
        %v1985 = vpop.permute.xlu0 %1984
        %1986 = vrot.lane.b32.xlu0 %v1636, 64
        %v1987 = vpop.permute.xlu0 %1986
        %1988 = vrot.lane.b32.xlu0 %v1637, 64
        %v1989 = vpop.permute.xlu0 %1988
        %v2022 = vsel %vm748, %v1445, %v1671
        %v2023 = vsel %vm748, %v1446, %v1673
        %v2024 = vsel %vm748, %v1447, %v1675
        %v2025 = vsel %vm748, %v1448, %v1677
        %v2026 = vsel %vm748, %v1449, %v1679
        %v2027 = vsel %vm748, %v1450, %v1681
        %v2028 = vsel %vm748, %v1451, %v1683
        %v2029 = vsel %vm748, %v1452, %v1685
        %v2030 = vsel %vm748, %v1453, %v1687
        %v2031 = vsel %vm748, %v1454, %v1689
        %v2032 = vsel %vm748, %v1455, %v1691
        %v2033 = vsel %vm748, %v1456, %v1693
        %v2034 = vsel %vm748, %v1457, %v1695
        %v2035 = vsel %vm748, %v1458, %v1697
        %v2036 = vsel %vm748, %v1459, %v1699
        %v2037 = vsel %vm748, %v1460, %v1701
        %v2038 = vsel %vm748, %v1461, %v1703
        %v2039 = vsel %vm748, %v1462, %v1705
        %v2040 = vsel %vm748, %v1463, %v1707
        %v2041 = vsel %vm748, %v1464, %v1709
        %v2042 = vsel %vm748, %v1465, %v1711
        %v2043 = vsel %vm748, %v1466, %v1713
        %v2044 = vsel %vm748, %v1467, %v1715
        %v2045 = vsel %vm748, %v1468, %v1717
        %v2046 = vsel %vm748, %v1469, %v1719
        %v2047 = vsel %vm748, %v1470, %v1721
        %v2048 = vsel %vm748, %v1471, %v1723
        %v2049 = vsel %vm748, %v1472, %v1725
        %v2050 = vsel %vm748, %v1473, %v1727
        %v2051 = vsel %vm748, %v1474, %v1729
        %v2052 = vsel %vm748, %v1475, %v1731
        %v2053 = vsel %vm748, %v1476, %v1733
        %v2054 = vsel %vm748, %v1509, %v1799
        %v2055 = vsel %vm748, %v1510, %v1801
        %v2056 = vsel %vm748, %v1511, %v1803
        %v2057 = vsel %vm748, %v1512, %v1805
        %v2058 = vsel %vm748, %v1513, %v1807
        %v2059 = vsel %vm748, %v1514, %v1809
        %v2060 = vsel %vm748, %v1515, %v1811
        %v2061 = vsel %vm748, %v1516, %v1813
        %v2062 = vsel %vm748, %v1517, %v1815
        %v2063 = vsel %vm748, %v1518, %v1817
        %v2064 = vsel %vm748, %v1519, %v1819
        %v2065 = vsel %vm748, %v1520, %v1821
        %v2066 = vsel %vm748, %v1521, %v1823
        %v2067 = vsel %vm748, %v1522, %v1825
        %v2068 = vsel %vm748, %v1523, %v1827
        %v2069 = vsel %vm748, %v1524, %v1829
        %v2070 = vsel %vm748, %v1525, %v1831
        %v2071 = vsel %vm748, %v1526, %v1833
        %v2072 = vsel %vm748, %v1527, %v1835
        %v2073 = vsel %vm748, %v1528, %v1837
        %v2074 = vsel %vm748, %v1529, %v1839
        %v2075 = vsel %vm748, %v1530, %v1841
        %v2076 = vsel %vm748, %v1531, %v1843
        %v2077 = vsel %vm748, %v1532, %v1845
        %v2078 = vsel %vm748, %v1533, %v1847
        %v2079 = vsel %vm748, %v1534, %v1849
        %v2080 = vsel %vm748, %v1535, %v1851
        %v2081 = vsel %vm748, %v1536, %v1853
        %v2082 = vsel %vm748, %v1537, %v1855
        %v2083 = vsel %vm748, %v1538, %v1857
        %v2084 = vsel %vm748, %v1539, %v1859
        %v2085 = vsel %vm748, %v1540, %v1861
        %v2086 = vsel %vm748, %v1574, %v1927
        %v2087 = vsel %vm748, %v1575, %v1929
        %v2088 = vsel %vm748, %v1576, %v1931
        %v2089 = vsel %vm748, %v1577, %v1933
        %v2090 = vsel %vm748, %v1578, %v1935
        %v2091 = vsel %vm748, %v1579, %v1937
        %v2092 = vsel %vm748, %v1580, %v1939
        %v2093 = vsel %vm748, %v1581, %v1941
        %v2094 = vsel %vm748, %v1582, %v1943
        %v2095 = vsel %vm748, %v1583, %v1945
        %v2096 = vsel %vm748, %v1584, %v1947
        %v2097 = vsel %vm748, %v1585, %v1949
        %v2098 = vsel %vm748, %v1586, %v1951
        %v2099 = vsel %vm748, %v1587, %v1953
        %v2100 = vsel %vm748, %v1588, %v1955
        %v2101 = vsel %vm748, %v1589, %v1957
        %v2102 = vsel %vm748, %v1590, %v1959
        %v2103 = vsel %vm748, %v1591, %v1961
        %v2104 = vsel %vm748, %v1592, %v1963
        %v2105 = vsel %vm748, %v1593, %v1965
        %v2106 = vsel %vm748, %v1594, %v1967
        %v2107 = vsel %vm748, %v1595, %v1969
        %v2108 = vsel %vm748, %v1596, %v1971
        %v2109 = vsel %vm748, %v1597, %v1973
        %v2110 = vsel %vm748, %v1598, %v1975
        %v2111 = vsel %vm748, %v1599, %v1977
        %v2112 = vsel %vm748, %v1600, %v1979
        %v2113 = vsel %vm748, %v1601, %v1981
        %v2114 = vsel %vm748, %v1602, %v1983
        %v2115 = vsel %vm748, %v1603, %v1985
        %v2116 = vsel %vm748, %v1604, %v1987
        %v2117 = vsel %vm748, %v1605, %v1989
        %v2118 = vpack.c.bf16 %v2023, %v2022
        %v2119 = vpack.c.bf16 %v2055, %v2054
        %v2120 = vpack.c.bf16 %v2087, %v2086
        %v2121 = vpack.c.bf16 %v2025, %v2024
        %v2122 = vpack.c.bf16 %v2057, %v2056
        %v2123 = vpack.c.bf16 %v2089, %v2088
        %v2124 = vpack.c.bf16 %v2027, %v2026
        %v2125 = vpack.c.bf16 %v2059, %v2058
        %v2126 = vpack.c.bf16 %v2091, %v2090
        %v2127 = vpack.c.bf16 %v2029, %v2028
        %v2128 = vpack.c.bf16 %v2061, %v2060
        %v2129 = vpack.c.bf16 %v2093, %v2092
        %v2130 = vpack.c.bf16 %v2031, %v2030
        %v2131 = vpack.c.bf16 %v2063, %v2062
        %v2132 = vpack.c.bf16 %v2095, %v2094
        %v2133 = vpack.c.bf16 %v2033, %v2032
        %v2134 = vpack.c.bf16 %v2065, %v2064
        %v2135 = vpack.c.bf16 %v2097, %v2096
        %v2136 = vpack.c.bf16 %v2035, %v2034
        %v2137 = vpack.c.bf16 %v2067, %v2066
        %v2138 = vpack.c.bf16 %v2099, %v2098
        %v2139 = vpack.c.bf16 %v2037, %v2036
        %v2140 = vpack.c.bf16 %v2069, %v2068
        %v2141 = vpack.c.bf16 %v2101, %v2100
        %v2142 = vpack.c.bf16 %v2039, %v2038
        %v2143 = vpack.c.bf16 %v2071, %v2070
        %v2144 = vpack.c.bf16 %v2103, %v2102
        %v2145 = vpack.c.bf16 %v2041, %v2040
        %v2146 = vpack.c.bf16 %v2073, %v2072
        %v2147 = vpack.c.bf16 %v2105, %v2104
        %v2148 = vpack.c.bf16 %v2043, %v2042
        %v2149 = vpack.c.bf16 %v2075, %v2074
        %v2150 = vpack.c.bf16 %v2107, %v2106
        %v2151 = vpack.c.bf16 %v2045, %v2044
        %v2152 = vpack.c.bf16 %v2077, %v2076
        %v2153 = vpack.c.bf16 %v2109, %v2108
        %v2154 = vpack.c.bf16 %v2047, %v2046
        %v2155 = vpack.c.bf16 %v2079, %v2078
        %v2156 = vpack.c.bf16 %v2111, %v2110
        %v2157 = vpack.c.bf16 %v2049, %v2048
        %v2158 = vpack.c.bf16 %v2081, %v2080
        %v2159 = vpack.c.bf16 %v2113, %v2112
        %v2160 = vpack.c.bf16 %v2051, %v2050
        %v2161 = vpack.c.bf16 %v2083, %v2082
        %v2162 = vpack.c.bf16 %v2115, %v2114
        %v2163 = vpack.c.bf16 %v2053, %v2052
        %v2164 = vpack.c.bf16 %v2085, %v2084
        %v2165 = vpack.c.bf16 %v2117, %v2116
        %s2166 = scalar_lea.vmem %s1, 192
        %v2167 = vld [vmem:[%s2166] sm:$0xf]
        %v2168 = vld [vmem:[%s2166 + $0x4] sm:$0xf]
        %v2169 = vld [vmem:[%s2166 + $0x8] sm:$0xf]
        %v2170 = vld [vmem:[%s2166 + $0xc] sm:$0xf]
        %v2171 = vld [vmem:[%s2166 + $0x10] sm:$0xf]
        %v2172 = vld [vmem:[%s2166 + $0x14] sm:$0xf]
        %v2173 = vld [vmem:[%s2166 + $0x18] sm:$0xf]
        %v2174 = vld [vmem:[%s2166 + $0x1c] sm:$0xf]
        %v2175 = vld [vmem:[%s2166 + $0x20] sm:$0xf]
        %v2176 = vld [vmem:[%s2166 + $0x24] sm:$0xf]
        %v2177 = vld [vmem:[%s2166 + $0x28] sm:$0xf]
        %v2178 = vld [vmem:[%s2166 + $0x2c] sm:$0xf]
        %v2179 = vld [vmem:[%s2166 + $0x30] sm:$0xf]
        %v2180 = vld [vmem:[%s2166 + $0x34] sm:$0xf]
        %v2181 = vld [vmem:[%s2166 + $0x38] sm:$0xf]
        %v2182 = vld [vmem:[%s2166 + $0x3c] sm:$0xf]
        %v2183 = vld [vmem:[%s2166 + $0x40] sm:$0xf]
        %v2184 = vld [vmem:[%s2166 + $0x44] sm:$0xf]
        %v2185 = vld [vmem:[%s2166 + $0x48] sm:$0xf]
        %v2186 = vld [vmem:[%s2166 + $0x4c] sm:$0xf]
        %v2187 = vld [vmem:[%s2166 + $0x50] sm:$0xf]
        %v2188 = vld [vmem:[%s2166 + $0x54] sm:$0xf]
        %v2189 = vld [vmem:[%s2166 + $0x58] sm:$0xf]
        %v2190 = vld [vmem:[%s2166 + $0x5c] sm:$0xf]
        %v2191 = vld [vmem:[%s2166 + $0x60] sm:$0xf]
        %v2192 = vld [vmem:[%s2166 + $0x64] sm:$0xf]
        %v2193 = vld [vmem:[%s2166 + $0x68] sm:$0xf]
        %v2194 = vld [vmem:[%s2166 + $0x6c] sm:$0xf]
        %v2195 = vld [vmem:[%s2166 + $0x70] sm:$0xf]
        %v2196 = vld [vmem:[%s2166 + $0x74] sm:$0xf]
        %v2197 = vld [vmem:[%s2166 + $0x78] sm:$0xf]
        %v2198 = vld [vmem:[%s2166 + $0x7c] sm:$0xf]
        %v2199 = vld [vmem:[%s2166 + $0x80] sm:$0xf]
        %v2200 = vld [vmem:[%s2166 + $0x84] sm:$0xf]
        %v2201 = vld [vmem:[%s2166 + $0x88] sm:$0xf]
        %v2202 = vld [vmem:[%s2166 + $0x8c] sm:$0xf]
        %v2203 = vld [vmem:[%s2166 + $0x90] sm:$0xf]
        %v2204 = vld [vmem:[%s2166 + $0x94] sm:$0xf]
        %v2205 = vld [vmem:[%s2166 + $0x98] sm:$0xf]
        %v2206 = vld [vmem:[%s2166 + $0x9c] sm:$0xf]
        %v2207 = vld [vmem:[%s2166 + $0xa0] sm:$0xf]
        %v2208 = vld [vmem:[%s2166 + $0xa4] sm:$0xf]
        %v2209 = vld [vmem:[%s2166 + $0xa8] sm:$0xf]
        %v2210 = vld [vmem:[%s2166 + $0xac] sm:$0xf]
        %v2211 = vld [vmem:[%s2166 + $0xb0] sm:$0xf]
        %v2212 = vld [vmem:[%s2166 + $0xb4] sm:$0xf]
        %v2213 = vld [vmem:[%s2166 + $0xb8] sm:$0xf]
        %v2214 = vld [vmem:[%s2166 + $0xbc] sm:$0xf]
        %v2263 = vunpack.c.l.b16 %v2167
        %v2264 = vunpack.c.l.b16 %v2168
        %v2265 = vunpack.c.l.b16 %v2169
        %v2266 = vunpack.c.l.b16 %v2170
        %v2267 = vunpack.c.l.b16 %v2171
        %v2268 = vunpack.c.l.b16 %v2172
        %v2269 = vunpack.c.l.b16 %v2173
        %v2270 = vunpack.c.l.b16 %v2174
        %v2271 = vunpack.c.l.b16 %v2175
        %v2272 = vunpack.c.l.b16 %v2176
        %v2273 = vunpack.c.l.b16 %v2177
        %v2274 = vunpack.c.l.b16 %v2178
        %v2275 = vunpack.c.l.b16 %v2179
        %v2276 = vunpack.c.l.b16 %v2180
        %v2277 = vunpack.c.l.b16 %v2181
        %v2278 = vunpack.c.l.b16 %v2182
        %v2279 = vunpack.c.l.b16 %v2183
        %v2280 = vunpack.c.l.b16 %v2184
        %v2281 = vunpack.c.l.b16 %v2185
        %v2282 = vunpack.c.l.b16 %v2186
        %v2283 = vunpack.c.l.b16 %v2187
        %v2284 = vunpack.c.l.b16 %v2188
        %v2285 = vunpack.c.l.b16 %v2189
        %v2286 = vunpack.c.l.b16 %v2190
        %v2287 = vunpack.c.l.b16 %v2191
        %v2288 = vunpack.c.l.b16 %v2192
        %v2289 = vunpack.c.l.b16 %v2193
        %v2290 = vunpack.c.l.b16 %v2194
        %v2291 = vunpack.c.l.b16 %v2195
        %v2292 = vunpack.c.l.b16 %v2196
        %v2293 = vunpack.c.l.b16 %v2197
        %v2294 = vunpack.c.l.b16 %v2198
        %v2295 = vunpack.c.l.b16 %v2199
        %v2296 = vunpack.c.l.b16 %v2200
        %v2297 = vunpack.c.l.b16 %v2201
        %v2298 = vunpack.c.l.b16 %v2202
        %v2299 = vunpack.c.l.b16 %v2203
        %v2300 = vunpack.c.l.b16 %v2204
        %v2301 = vunpack.c.l.b16 %v2205
        %v2302 = vunpack.c.l.b16 %v2206
        %v2303 = vunpack.c.l.b16 %v2207
        %v2304 = vunpack.c.l.b16 %v2208
        %v2305 = vunpack.c.l.b16 %v2209
        %v2306 = vunpack.c.l.b16 %v2210
        %v2307 = vunpack.c.l.b16 %v2211
        %v2308 = vunpack.c.l.b16 %v2212
        %v2309 = vunpack.c.l.b16 %v2213
        %v2310 = vunpack.c.l.b16 %v2214
        %v2311 = vpack.c.b16 %v2264, %v2263
        %v2312 = vpack.c.b16 %v2266, %v2265
        %v2313 = vpack.c.b16 %v2268, %v2267
        %v2314 = vpack.c.b16 %v2270, %v2269
        %v2315 = vpack.c.b16 %v2272, %v2271
        %v2316 = vpack.c.b16 %v2274, %v2273
        %v2317 = vpack.c.b16 %v2276, %v2275
        %v2318 = vpack.c.b16 %v2278, %v2277
        %v2319 = vpack.c.b16 %v2280, %v2279
        %v2320 = vpack.c.b16 %v2282, %v2281
        %v2321 = vpack.c.b16 %v2284, %v2283
        %v2322 = vpack.c.b16 %v2286, %v2285
        %v2323 = vpack.c.b16 %v2288, %v2287
        %v2324 = vpack.c.b16 %v2290, %v2289
        %v2325 = vpack.c.b16 %v2292, %v2291
        %v2326 = vpack.c.b16 %v2294, %v2293
        %v2327 = vpack.c.b16 %v2296, %v2295
        %v2328 = vpack.c.b16 %v2298, %v2297
        %v2329 = vpack.c.b16 %v2300, %v2299
        %v2330 = vpack.c.b16 %v2302, %v2301
        %v2331 = vpack.c.b16 %v2304, %v2303
        %v2332 = vpack.c.b16 %v2306, %v2305
        %v2333 = vpack.c.b16 %v2308, %v2307
        %v2334 = vpack.c.b16 %v2310, %v2309
        %2359 = vmatprep.subr.bf16.mxu0 0
        %2360 = vmatpush1.bf16.msra.mxu0 %v2311
        %2361 = vmatprep.subr.bf16.mxu0 0
        %2362 = vmatpush1.bf16.msra.mxu0 %v2312
        %2363 = vmatprep.subr.bf16.mxu0 0
        %2364 = vmatpush1.bf16.msra.mxu0 %v2313
        %2365 = vmatprep.subr.bf16.mxu0 0
        %2366 = vmatpush1.bf16.msra.mxu0 %v2314
        %2367 = vmatprep.subr.bf16.mxu0 0
        %2368 = vmatpush1.bf16.msra.mxu0 %v2315
        %2369 = vmatprep.subr.bf16.mxu0 0
        %2370 = vmatpush1.bf16.msra.mxu0 %v2316
        %2371 = vmatprep.subr.bf16.mxu0 0
        %2372 = vmatpush1.bf16.msra.mxu0 %v2317
        %2373 = vmatprep.subr.bf16.mxu0 0
        %2374 = vmatpush1.bf16.msra.mxu0 %v2318
        %2375 = vmatprep.subr.bf16.mxu0 0
        %2376 = vmatpush1.bf16.msra.mxu0 %v2319
        %2377 = vmatprep.subr.bf16.mxu0 0
        %2378 = vmatpush1.bf16.msra.mxu0 %v2320
        %2379 = vmatprep.subr.bf16.mxu0 0
        %2380 = vmatpush1.bf16.msra.mxu0 %v2321
        %2381 = vmatprep.subr.bf16.mxu0 0
        %2382 = vmatpush1.bf16.msra.mxu0 %v2322
        %2383 = vmatprep.subr.bf16.mxu0 0
        %2384 = vmatpush1.bf16.msra.mxu0 %v2323
        %2385 = vmatprep.subr.bf16.mxu0 0
        %2386 = vmatpush1.bf16.msra.mxu0 %v2324
        %2387 = vmatprep.subr.bf16.mxu0 0
        %2388 = vmatpush1.bf16.msra.mxu0 %v2325
        %2389 = vmatprep.subr.bf16.mxu0 0
        %2390 = vmatpush1.bf16.msra.mxu0 %v2326
        %2391 = vmatprep.mubr.bf16.mxu0 %v2119
        %2392 = vmatmul.mubr.bf16.gmra.mrb[0].mxu0 %v2118
        %v2393 = vpop.f32.mrb[0].mxu0
        %v2394 = vadd.f32 %v945, %v2393
        %v2395 = vpop.f32.mrb[0].mxu0
        %v2396 = vpop.f32.mrb[0].mxu0
        %v2397 = vadd.f32 %v945, %v2396
        %v2398 = vpop.f32.mrb[0].mxu0
        %2399 = vmatprep.mubr.bf16.mxu0 %v2122
        %2400 = vmatmul.mubr.bf16.gmra.mrb[0].mxu0 %v2121
        %v2401 = vpop.f32.mrb[0].mxu0
        %v2402 = vadd.f32 %v945, %v2401
        %v2403 = vpop.f32.mrb[0].mxu0
        %v2404 = vpop.f32.mrb[0].mxu0
        %v2405 = vadd.f32 %v945, %v2404
        %v2406 = vpop.f32.mrb[0].mxu0
        %2407 = vmatprep.mubr.bf16.mxu0 %v2125
        %2408 = vmatmul.mubr.bf16.gmra.mrb[0].mxu0 %v2124
        %v2409 = vpop.f32.mrb[0].mxu0
        %v2410 = vadd.f32 %v945, %v2409
        %v2411 = vpop.f32.mrb[0].mxu0
        %v2412 = vpop.f32.mrb[0].mxu0
        %v2413 = vadd.f32 %v945, %v2412
        %v2414 = vpop.f32.mrb[0].mxu0
        %2415 = vmatprep.mubr.bf16.mxu0 %v2128
        %2416 = vmatmul.mubr.bf16.gmra.mrb[0].mxu0 %v2127
        %v2417 = vpop.f32.mrb[0].mxu0
        %v2418 = vadd.f32 %v945, %v2417
        %v2419 = vpop.f32.mrb[0].mxu0
        %v2420 = vpop.f32.mrb[0].mxu0
        %v2421 = vadd.f32 %v945, %v2420
        %v2422 = vpop.f32.mrb[0].mxu0
        %2423 = vmatprep.mubr.bf16.mxu0 %v2131
        %2424 = vmatmul.mubr.bf16.gmra.mrb[0].mxu0 %v2130
        %v2425 = vpop.f32.mrb[0].mxu0
        %v2426 = vadd.f32 %v945, %v2425
        %v2427 = vpop.f32.mrb[0].mxu0
        %v2428 = vpop.f32.mrb[0].mxu0
        %v2429 = vadd.f32 %v945, %v2428
        %v2430 = vpop.f32.mrb[0].mxu0
        %2431 = vmatprep.mubr.bf16.mxu0 %v2134
        %2432 = vmatmul.mubr.bf16.gmra.mrb[0].mxu0 %v2133
        %v2433 = vpop.f32.mrb[0].mxu0
        %v2434 = vadd.f32 %v945, %v2433
        %v2435 = vpop.f32.mrb[0].mxu0
        %v2436 = vpop.f32.mrb[0].mxu0
        %v2437 = vadd.f32 %v945, %v2436
        %v2438 = vpop.f32.mrb[0].mxu0
        %2439 = vmatprep.mubr.bf16.mxu0 %v2137
        %2440 = vmatmul.mubr.bf16.gmra.mrb[0].mxu0 %v2136
        %v2441 = vpop.f32.mrb[0].mxu0
        %v2442 = vadd.f32 %v945, %v2441
        %v2443 = vpop.f32.mrb[0].mxu0
        %v2444 = vpop.f32.mrb[0].mxu0
        %v2445 = vadd.f32 %v945, %v2444
        %v2446 = vpop.f32.mrb[0].mxu0
        %2447 = vmatprep.mubr.bf16.mxu0 %v2140
        %2448 = vmatmul.mubr.bf16.gmra.mrb[0].mxu0 %v2139
        %v2449 = vpop.f32.mrb[0].mxu0
        %v2450 = vadd.f32 %v945, %v2449
        %v2451 = vpop.f32.mrb[0].mxu0
        %v2452 = vpop.f32.mrb[0].mxu0
        %v2453 = vadd.f32 %v945, %v2452
        %v2454 = vpop.f32.mrb[0].mxu0
        %2455 = vmatprep.mubr.bf16.mxu0 %v2143
        %2456 = vmatmul.mubr.bf16.gmra.mrb[0].mxu0 %v2142
        %v2457 = vpop.f32.mrb[0].mxu0
        %v2458 = vadd.f32 %v945, %v2457
        %v2459 = vpop.f32.mrb[0].mxu0
        %v2460 = vpop.f32.mrb[0].mxu0
        %v2461 = vadd.f32 %v945, %v2460
        %v2462 = vpop.f32.mrb[0].mxu0
        %2463 = vmatprep.mubr.bf16.mxu0 %v2146
        %2464 = vmatmul.mubr.bf16.gmra.mrb[0].mxu0 %v2145
        %v2465 = vpop.f32.mrb[0].mxu0
        %v2466 = vadd.f32 %v945, %v2465
        %v2467 = vpop.f32.mrb[0].mxu0
        %v2468 = vpop.f32.mrb[0].mxu0
        %v2469 = vadd.f32 %v945, %v2468
        %v2470 = vpop.f32.mrb[0].mxu0
        %2471 = vmatprep.mubr.bf16.mxu0 %v2149
        %2472 = vmatmul.mubr.bf16.gmra.mrb[0].mxu0 %v2148
        %v2473 = vpop.f32.mrb[0].mxu0
        %v2474 = vadd.f32 %v945, %v2473
        %v2475 = vpop.f32.mrb[0].mxu0
        %v2476 = vpop.f32.mrb[0].mxu0
        %v2477 = vadd.f32 %v945, %v2476
        %v2478 = vpop.f32.mrb[0].mxu0
        %2479 = vmatprep.mubr.bf16.mxu0 %v2152
        %2480 = vmatmul.mubr.bf16.gmra.mrb[0].mxu0 %v2151
        %v2481 = vpop.f32.mrb[0].mxu0
        %v2482 = vadd.f32 %v945, %v2481
        %v2483 = vpop.f32.mrb[0].mxu0
        %v2484 = vpop.f32.mrb[0].mxu0
        %v2485 = vadd.f32 %v945, %v2484
        %v2486 = vpop.f32.mrb[0].mxu0
        %2487 = vmatprep.mubr.bf16.mxu0 %v2155
        %2488 = vmatmul.mubr.bf16.gmra.mrb[0].mxu0 %v2154
        %v2489 = vpop.f32.mrb[0].mxu0
        %v2490 = vadd.f32 %v945, %v2489
        %v2491 = vpop.f32.mrb[0].mxu0
        %v2492 = vpop.f32.mrb[0].mxu0
        %v2493 = vadd.f32 %v945, %v2492
        %v2494 = vpop.f32.mrb[0].mxu0
        %2495 = vmatprep.mubr.bf16.mxu0 %v2158
        %2496 = vmatmul.mubr.bf16.gmra.mrb[0].mxu0 %v2157
        %v2497 = vpop.f32.mrb[0].mxu0
        %v2498 = vadd.f32 %v945, %v2497
        %v2499 = vpop.f32.mrb[0].mxu0
        %v2500 = vpop.f32.mrb[0].mxu0
        %v2501 = vadd.f32 %v945, %v2500
        %v2502 = vpop.f32.mrb[0].mxu0
        %2503 = vmatprep.mubr.bf16.mxu0 %v2161
        %2504 = vmatmul.mubr.bf16.gmra.mrb[0].mxu0 %v2160
        %v2505 = vpop.f32.mrb[0].mxu0
        %v2506 = vadd.f32 %v945, %v2505
        %v2507 = vpop.f32.mrb[0].mxu0
        %v2508 = vpop.f32.mrb[0].mxu0
        %v2509 = vadd.f32 %v945, %v2508
        %v2510 = vpop.f32.mrb[0].mxu0
        %2511 = vmatprep.mubr.bf16.mxu0 %v2164
        %2512 = vmatmul.mubr.bf16.gmra.mrb[0].mxu0 %v2163
        %v2513 = vpop.f32.mrb[0].mxu0
        %v2514 = vadd.f32 %v945, %v2513
        %v2515 = vpop.f32.mrb[0].mxu0
        %v2516 = vpop.f32.mrb[0].mxu0
        %v2517 = vadd.f32 %v945, %v2516
        %v2518 = vpop.f32.mrb[0].mxu0
        %2519 = vdwg.mxu0
        %2520 = vmatprep.subr.bf16.mxu0 0
        %2521 = vmatpush1.bf16.msra.mxu0 %v2327
        %2522 = vmatprep.subr.bf16.mxu0 0
        %2523 = vmatpush1.bf16.msra.mxu0 %v2328
        %2524 = vmatprep.subr.bf16.mxu0 0
        %2525 = vmatpush1.bf16.msra.mxu0 %v2329
        %2526 = vmatprep.subr.bf16.mxu0 0
        %2527 = vmatpush1.bf16.msra.mxu0 %v2330
        %2528 = vmatprep.subr.bf16.mxu0 0
        %2529 = vmatpush1.bf16.msra.mxu0 %v2331
        %2530 = vmatprep.subr.bf16.mxu0 0
        %2531 = vmatpush1.bf16.msra.mxu0 %v2332
        %2532 = vmatprep.subr.bf16.mxu0 0
        %2533 = vmatpush1.bf16.msra.mxu0 %v2333
        %2534 = vmatprep.subr.bf16.mxu0 0
        %2535 = vmatpush1.bf16.msra.mxu0 %v2334
        %2536 = vmatprep.subr.bf16.mxu0 0
        %2537 = vmatpush1.bf16.msra.mxu0 0
        %2538 = vmatprep.subr.bf16.mxu0 0
        %2539 = vmatpush1.bf16.msra.mxu0 0
        %2540 = vmatprep.subr.bf16.mxu0 0
        %2541 = vmatpush1.bf16.msra.mxu0 0
        %2542 = vmatprep.subr.bf16.mxu0 0
        %2543 = vmatpush1.bf16.msra.mxu0 0
        %2544 = vmatprep.subr.bf16.mxu0 0
        %2545 = vmatpush1.bf16.msra.mxu0 0
        %2546 = vmatprep.subr.bf16.mxu0 0
        %2547 = vmatpush1.bf16.msra.mxu0 0
        %2548 = vmatprep.subr.bf16.mxu0 0
        %2549 = vmatpush1.bf16.msra.mxu0 0
        %2550 = vmatprep.subr.bf16.mxu0 0
        %2551 = vmatpush1.bf16.msra.mxu0 0
        %2552 = vmatprep.mubr.bf16.mxu0 0
        %2553 = vmatmul.mubr.bf16.gmra.mrb[0].mxu0 %v2120
        %v2554 = vpop.f32.mrb[0].mxu0
        %v2555 = vadd.f32 %v2394, %v2554
        %v2556 = vpop.f32.mrb[0].mxu0
        %v2557 = vpop.f32.mrb[0].mxu0
        %v2558 = vadd.f32 %v2397, %v2557
        %v2559 = vpop.f32.mrb[0].mxu0
        %2560 = vmatprep.mubr.bf16.mxu0 0
        %2561 = vmatmul.mubr.bf16.gmra.mrb[0].mxu0 %v2123
        %v2562 = vpop.f32.mrb[0].mxu0
        %v2563 = vadd.f32 %v2402, %v2562
        %v2564 = vpop.f32.mrb[0].mxu0
        %v2565 = vpop.f32.mrb[0].mxu0
        %v2566 = vadd.f32 %v2405, %v2565
        %v2567 = vpop.f32.mrb[0].mxu0
        %2568 = vmatprep.mubr.bf16.mxu0 0
        %2569 = vmatmul.mubr.bf16.gmra.mrb[0].mxu0 %v2126
        %v2570 = vpop.f32.mrb[0].mxu0
        %v2571 = vadd.f32 %v2410, %v2570
        %v2572 = vpop.f32.mrb[0].mxu0
        %v2573 = vpop.f32.mrb[0].mxu0
        %v2574 = vadd.f32 %v2413, %v2573
        %v2575 = vpop.f32.mrb[0].mxu0
        %2576 = vmatprep.mubr.bf16.mxu0 0
        %2577 = vmatmul.mubr.bf16.gmra.mrb[0].mxu0 %v2129
        %v2578 = vpop.f32.mrb[0].mxu0
        %v2579 = vadd.f32 %v2418, %v2578
        %v2580 = vpop.f32.mrb[0].mxu0
        %v2581 = vpop.f32.mrb[0].mxu0
        %v2582 = vadd.f32 %v2421, %v2581
        %v2583 = vpop.f32.mrb[0].mxu0
        %2584 = vmatprep.mubr.bf16.mxu0 0
        %2585 = vmatmul.mubr.bf16.gmra.mrb[0].mxu0 %v2132
        %v2586 = vpop.f32.mrb[0].mxu0
        %v2587 = vadd.f32 %v2426, %v2586
        %v2588 = vpop.f32.mrb[0].mxu0
        %v2589 = vpop.f32.mrb[0].mxu0
        %v2590 = vadd.f32 %v2429, %v2589
        %v2591 = vpop.f32.mrb[0].mxu0
        %2592 = vmatprep.mubr.bf16.mxu0 0
        %2593 = vmatmul.mubr.bf16.gmra.mrb[0].mxu0 %v2135
        %v2594 = vpop.f32.mrb[0].mxu0
        %v2595 = vadd.f32 %v2434, %v2594
        %v2596 = vpop.f32.mrb[0].mxu0
        %v2597 = vpop.f32.mrb[0].mxu0
        %v2598 = vadd.f32 %v2437, %v2597
        %v2599 = vpop.f32.mrb[0].mxu0
        %2600 = vmatprep.mubr.bf16.mxu0 0
        %2601 = vmatmul.mubr.bf16.gmra.mrb[0].mxu0 %v2138
        %v2602 = vpop.f32.mrb[0].mxu0
        %v2603 = vadd.f32 %v2442, %v2602
        %v2604 = vpop.f32.mrb[0].mxu0
        %v2605 = vpop.f32.mrb[0].mxu0
        %v2606 = vadd.f32 %v2445, %v2605
        %v2607 = vpop.f32.mrb[0].mxu0
        %2608 = vmatprep.mubr.bf16.mxu0 0
        %2609 = vmatmul.mubr.bf16.gmra.mrb[0].mxu0 %v2141
        %v2610 = vpop.f32.mrb[0].mxu0
        %v2611 = vadd.f32 %v2450, %v2610
        %v2612 = vpop.f32.mrb[0].mxu0
        %v2613 = vpop.f32.mrb[0].mxu0
        %v2614 = vadd.f32 %v2453, %v2613
        %v2615 = vpop.f32.mrb[0].mxu0
        %2616 = vmatprep.mubr.bf16.mxu0 0
        %2617 = vmatmul.mubr.bf16.gmra.mrb[0].mxu0 %v2144
        %v2618 = vpop.f32.mrb[0].mxu0
        %v2619 = vadd.f32 %v2458, %v2618
        %v2620 = vpop.f32.mrb[0].mxu0
        %v2621 = vpop.f32.mrb[0].mxu0
        %v2622 = vadd.f32 %v2461, %v2621
        %v2623 = vpop.f32.mrb[0].mxu0
        %2624 = vmatprep.mubr.bf16.mxu0 0
        %2625 = vmatmul.mubr.bf16.gmra.mrb[0].mxu0 %v2147
        %v2626 = vpop.f32.mrb[0].mxu0
        %v2627 = vadd.f32 %v2466, %v2626
        %v2628 = vpop.f32.mrb[0].mxu0
        %v2629 = vpop.f32.mrb[0].mxu0
        %v2630 = vadd.f32 %v2469, %v2629
        %v2631 = vpop.f32.mrb[0].mxu0
        %2632 = vmatprep.mubr.bf16.mxu0 0
        %2633 = vmatmul.mubr.bf16.gmra.mrb[0].mxu0 %v2150
        %v2634 = vpop.f32.mrb[0].mxu0
        %v2635 = vadd.f32 %v2474, %v2634
        %v2636 = vpop.f32.mrb[0].mxu0
        %v2637 = vpop.f32.mrb[0].mxu0
        %v2638 = vadd.f32 %v2477, %v2637
        %v2639 = vpop.f32.mrb[0].mxu0
        %2640 = vmatprep.mubr.bf16.mxu0 0
        %2641 = vmatmul.mubr.bf16.gmra.mrb[0].mxu0 %v2153
        %v2642 = vpop.f32.mrb[0].mxu0
        %v2643 = vadd.f32 %v2482, %v2642
        %v2644 = vpop.f32.mrb[0].mxu0
        %v2645 = vpop.f32.mrb[0].mxu0
        %v2646 = vadd.f32 %v2485, %v2645
        %v2647 = vpop.f32.mrb[0].mxu0
        %2648 = vmatprep.mubr.bf16.mxu0 0
        %2649 = vmatmul.mubr.bf16.gmra.mrb[0].mxu0 %v2156
        %v2650 = vpop.f32.mrb[0].mxu0
        %v2651 = vadd.f32 %v2490, %v2650
        %v2652 = vpop.f32.mrb[0].mxu0
        %v2653 = vpop.f32.mrb[0].mxu0
        %v2654 = vadd.f32 %v2493, %v2653
        %v2655 = vpop.f32.mrb[0].mxu0
        %2656 = vmatprep.mubr.bf16.mxu0 0
        %2657 = vmatmul.mubr.bf16.gmra.mrb[0].mxu0 %v2159
        %v2658 = vpop.f32.mrb[0].mxu0
        %v2659 = vadd.f32 %v2498, %v2658
        %v2660 = vpop.f32.mrb[0].mxu0
        %v2661 = vpop.f32.mrb[0].mxu0
        %v2662 = vadd.f32 %v2501, %v2661
        %v2663 = vpop.f32.mrb[0].mxu0
        %2664 = vmatprep.mubr.bf16.mxu0 0
        %2665 = vmatmul.mubr.bf16.gmra.mrb[0].mxu0 %v2162
        %v2666 = vpop.f32.mrb[0].mxu0
        %v2667 = vadd.f32 %v2506, %v2666
        %v2668 = vpop.f32.mrb[0].mxu0
        %v2669 = vpop.f32.mrb[0].mxu0
        %v2670 = vadd.f32 %v2509, %v2669
        %v2671 = vpop.f32.mrb[0].mxu0
        %2672 = vmatprep.mubr.bf16.mxu0 0
        %2673 = vmatmul.mubr.bf16.gmra.mrb[0].mxu0 %v2165
        %v2674 = vpop.f32.mrb[0].mxu0
        %v2675 = vadd.f32 %v2514, %v2674
        %v2676 = vpop.f32.mrb[0].mxu0
        %v2677 = vpop.f32.mrb[0].mxu0
        %v2678 = vadd.f32 %v2517, %v2677
        %v2679 = vpop.f32.mrb[0].mxu0
        %2680 = vdwg.mxu0
        %s2681 = scalar_lea.vmem %s163, 256 [#allocation2]
        %2682 = vst [vmem:[%s2681] sm:$0xff] %v2555
        %2683 = vst [vmem:[%s2681 + $0x8] sm:$0xff] %v2558
        %2684 = vst [vmem:[%s2681 + $0x10] sm:$0xff] %v2563
        %2685 = vst [vmem:[%s2681 + $0x18] sm:$0xff] %v2566
        %2686 = vst [vmem:[%s2681 + $0x20] sm:$0xff] %v2571
        %2687 = vst [vmem:[%s2681 + $0x28] sm:$0xff] %v2574
        %2688 = vst [vmem:[%s2681 + $0x30] sm:$0xff] %v2579
        %2689 = vst [vmem:[%s2681 + $0x38] sm:$0xff] %v2582
        %2690 = vst [vmem:[%s2681 + $0x40] sm:$0xff] %v2587
        %2691 = vst [vmem:[%s2681 + $0x48] sm:$0xff] %v2590
        %2692 = vst [vmem:[%s2681 + $0x50] sm:$0xff] %v2595
        %2693 = vst [vmem:[%s2681 + $0x58] sm:$0xff] %v2598
        %2694 = vst [vmem:[%s2681 + $0x60] sm:$0xff] %v2603
        %2695 = vst [vmem:[%s2681 + $0x68] sm:$0xff] %v2606
        %2696 = vst [vmem:[%s2681 + $0x70] sm:$0xff] %v2611
        %2697 = vst [vmem:[%s2681 + $0x78] sm:$0xff] %v2614
        %2698 = vst [vmem:[%s2681 + $0x80] sm:$0xff] %v2619
        %2699 = vst [vmem:[%s2681 + $0x88] sm:$0xff] %v2622
        %2700 = vst [vmem:[%s2681 + $0x90] sm:$0xff] %v2627
        %2701 = vst [vmem:[%s2681 + $0x98] sm:$0xff] %v2630
        %2702 = vst [vmem:[%s2681 + $0xa0] sm:$0xff] %v2635
        %2703 = vst [vmem:[%s2681 + $0xa8] sm:$0xff] %v2638
        %2704 = vst [vmem:[%s2681 + $0xb0] sm:$0xff] %v2643
        %2705 = vst [vmem:[%s2681 + $0xb8] sm:$0xff] %v2646
        %2706 = vst [vmem:[%s2681 + $0xc0] sm:$0xff] %v2651
        %2707 = vst [vmem:[%s2681 + $0xc8] sm:$0xff] %v2654
        %2708 = vst [vmem:[%s2681 + $0xd0] sm:$0xff] %v2659
        %2709 = vst [vmem:[%s2681 + $0xd8] sm:$0xff] %v2662
        %2710 = vst [vmem:[%s2681 + $0xe0] sm:$0xff] %v2667
        %2711 = vst [vmem:[%s2681 + $0xe8] sm:$0xff] %v2670
        %2712 = vst [vmem:[%s2681 + $0xf0] sm:$0xff] %v2675
        %2713 = vst [vmem:[%s2681 + $0xf8] sm:$0xff] %v2678
        %s2714 = sand.u32 %s93, 1
        %s2715 = scalar_lea.sflag [#allocation3], %s2714
        %s2716 = sand.u32 %s93, 1
        %s2717 = smul.addr %s2716, 512
        %s2718 = scalar_lea.vmem [#allocation2], %s2717
        // Predicated region
        $region33: #{tpu_custom_call.1} parent=31 // pred_check
          %p2719 = pneg %p103
        $region34: #{tpu_custom_call.1} parent=31 // pred_check_branch
          %2721 = sbr.rel (%p2719) target = $region36
        $region35: #{tpu_custom_call.1} parent=31 // pred_region
          %s2723 = ssub.s32 8192, 8192
          %2724 = vsyncadd %s2715, %s2723
          %s2725 = smul.addr %s17, 64
          %s2726 = smul.addr %s2725, 128
          %s2727 = scalar_lea.hbm %s3, %s2726
          %s2728 = sshll.u32 %s2718, 4
          %s2729 = int_to_ptr.vmem [resolvable:$true] %s2728
          %2734 = dma.vmem_to_hbm [thread:$0]  %s2729, 8192, %s2727, %s2715, 128, 128, 8
        $region36: #{tpu_custom_call.1} parent=31 // pred_fallthru
          _
      $region32: #{tpu_custom_call.1} parent=5 // pred_fallthru
        _
      %p2735 = scmp.le.s32.totalorder 2, %s12
      // Predicated region
      $region37: #{tpu_custom_call.1} parent=5 // pred_check
        %p2736 = pneg %p2735
      $region38: #{tpu_custom_call.1} parent=5 // pred_check_branch
        %2738 = sbr.rel (%p2736) target = $region40
      $region39: #{tpu_custom_call.1} parent=5 // pred_region
        %s2739 = ssub.s32 %s12, 2
        // Predicated region
        $region41: #{tpu_custom_call.1} parent=39 // pred_check
          %p2740 = pneg %p109
        $region42: #{tpu_custom_call.1} parent=39 // pred_check_branch
          %2742 = sbr.rel (%p2740) target = $region44
        $region43: #{tpu_custom_call.1} parent=39 // pred_region
          %s2743 = sand.u32 %s94, 1
          %s2744 = scalar_lea.sflag [#allocation3], %s2743
          %s2745 = sand.u32 %s94, 1
          %s2746 = smul.addr %s2745, 512
          %s2747 = scalar_lea.vmem [#allocation2], %s2746
          %2748 = dma.done %s2744, 8192
        $region44: #{tpu_custom_call.1} parent=39 // pred_fallthru
          _
      $region40: #{tpu_custom_call.1} parent=5 // pred_fallthru
        _
    $region6: #{tpu_custom_call.1} parent=1 // loop_footer
      %s16 = sadd.s32 1, %s12
    $region7: #{tpu_custom_call.1} parent=1 // loop_footer_branch
      %11 = sbr.rel target = $region3
    $region8: #{tpu_custom_call.1} parent=1 // loop_exit
      _
    %2749 = vsyncpa [#allocation3], 1
    %s2750 = scalar_lea.sflag [#allocation3], 1
    %2751 = vsyncpa %s2750, 1

</llo_original>
